<compile_context>
chip_gen: v7x
topology: tpu7x:2x2x1
jax: 0.10.0
libtpu: 0.0.40
codegen_flags: <defaults>
</compile_context>

<pallas_src>
import functools

import numpy as np

import jax
import jax.numpy as jnp
from jax.experimental import pallas as pl
from jax.experimental.pallas import tpu as pltpu


def _round_up(x, m):
    return ((x + m - 1) // m) * m


def _vmem_capacity_bytes():
    """Per-TensorCore VMEM capacity; conservative fallback if the query fails."""
    try:
        return int(pltpu.get_tpu_info().vmem_capacity_bytes)
    except Exception:
        return 64 * 1024 * 1024  # v7x per-TC size: safe lower bound for all gens


def _select_tiling(n, hp, num_heads, out_itemsize):
    """Generation-aware destination-row tile size and VMEM limit."""
    cap = _vmem_capacity_bytes()
    # ~48 MiB on v7x (64 MiB/TC), ~96 MiB on v5e/v6e (128 MiB); never below 32 MiB.
    vmem_limit = max(32 * 1024 * 1024, min(100 * 1024 * 1024, int(0.75 * cap)))

    resident = n * hp * 2 + num_heads * n * 4          # z (bf16) + s_src (f32)
    budget = int(0.6 * vmem_limit) - resident

    def fits(t):
        per_step = (2 * t * n * 2                      # double-buffered bf16 bias tile
                    + 2 * t * num_heads * 4            # double-buffered s_dst tile
                    + 2 * t * hp * out_itemsize        # double-buffered output tile
                    + 4 * t * n * 4)                   # f32 softmax temporaries
        return per_step <= budget

    cands = [t for t in (512, 256, 128, 64, 32, 16, 8) if n % t == 0]
    pool = [t for t in cands if fits(t)] or cands
    if not pool:
        # TODO(synk): remainder-tile / padding path for awkward N.
        return n, vmem_limit
    # Prefer an even grid with >= 2 steps so v7x megacore gets balanced halves.
    even = [t for t in pool if (n // t) >= 2 and (n // t) % 2 == 0]
    return (even[0] if even else pool[0]), vmem_limit


# ---------------------------------------------------------------------------
# Kernel (per destination-row tile; all heads fused; z / s_src / s_dst hoisted)
# ---------------------------------------------------------------------------
def _gat_attention_kernel(z_ref, s_src_ref, s_dst_ref, bias_ref, out_ref, *,
                          num_heads, head_pad, apply_elu):
    f32 = jnp.float32
    bias = bias_ref[...].astype(f32)                        # (T, N), shared by heads

    for hd in range(num_heads):                             # static unroll, H small
        lo = hd * head_pad                                  # 128-aligned lane offset
        z_h = z_ref[:, lo:lo + head_pad]                    # (N, P) bf16, resident
        s_src = s_src_ref[hd:hd + 1, :]                     # (1, N) f32
        s_dst = s_dst_ref[:, hd:hd + 1]                     # (T, 1) f32

        # e[v, u] = leaky_relu(a_src . z_u + a_dst . z_v) + (-1e30 off-edge bias)
        e = s_dst + s_src                                   # (T, N)
        e = jnp.maximum(e, 0.01 * e)                        # F.leaky_relu, slope 0.01
        e = e + bias

        # softmax over incoming edges (axis 1); normalization folded after matmul.
        m = jnp.max(e, axis=1, keepdims=True)
        p = jnp.exp(e - m)                                  # (T, N) f32 (EUP)
        denom = jnp.maximum(jnp.sum(p, axis=1, keepdims=True), f32(1e-20))

        # h_v = (sum_u p[v, u] * z_u) / denom[v]    (bf16 MXU operands, f32 acc)
        out_h = jnp.dot(p.astype(jnp.bfloat16), z_h,
                        preferred_element_type=f32)         # (T, P)
        out_h = out_h * pl.reciprocal(denom, approx=True)

        if apply_elu:
            # F.elu (alpha=1). ELU(0) = 0, so lane-padding columns stay zero.
            out_h = jnp.where(out_h > 0, out_h,
                              jnp.exp(jnp.minimum(out_h, 0.0)) - 1.0)
        out_ref[:, lo:lo + head_pad] = out_h.astype(out_ref.dtype)


# ---------------------------------------------------------------------------
# Wrapper: one fused multi-head GAT layer
# ---------------------------------------------------------------------------
def gat_layer_fused(h, w_all, a_src, a_dst, bias, *, apply_elu, out_dtype):
    """One fused multi-head GATLayer.

    h      : (N, in_dim) node features (padded physical layout allowed).
    w_all  : (in_dim, num_heads * head_pad) packed per-head fc weights (bf16).
    a_src  : (num_heads, head_pad) attention vector applied to source z.
    a_dst  : (num_heads, head_pad) attention vector applied to destination z.
    bias   : (N, N) bf16, 0 where edge u->v exists (dest-major), -1e30 otherwise.
    """
    n, in_dim = h.shape
    num_heads, head_pad = a_src.shape
    hp = num_heads * head_pad
    assert w_all.shape == (in_dim, hp)
    assert bias.shape == (n, n)

    # --- hoisted per-layer precompute (plain XLA; bf16 MXU operands, f32 acc) ---
    z_f32 = jnp.dot(h.astype(jnp.bfloat16), w_all.astype(jnp.bfloat16),
                    preferred_element_type=jnp.float32)        # (N, H*P)
    z3 = z_f32.reshape(n, num_heads, head_pad)
    s_src = jnp.einsum("nhp,hp->hn", z3, a_src)                # (H, N) f32
    s_dst = jnp.einsum("nhp,hp->nh", z3, a_dst)                # (N, H) f32
    z_bf = z_f32.astype(jnp.bfloat16)                          # resident kernel input

    out_itemsize = jnp.dtype(out_dtype).itemsize
    tile_v, vmem_limit = _select_tiling(n, hp, num_heads, out_itemsize)
    grid = (n // tile_v,)

    kernel = functools.partial(_gat_attention_kernel, num_heads=num_heads,
                               head_pad=head_pad, apply_elu=apply_elu)

    cost = pl.CostEstimate(
        flops=int(num_heads * (2 * n * n * head_pad + 8 * n * n)
                  + (n * hp if apply_elu else 0)),
        transcendentals=int(num_heads * n * n + (n * hp if apply_elu else 0)),
        bytes_accessed=int(n * n * 2 + n * hp * 2 + 2 * num_heads * n * 4
                           + n * hp * out_itemsize),
    )

    return pl.pallas_call(
        kernel,
        out_shape=jax.ShapeDtypeStruct((n, hp), out_dtype),
        grid=grid,
        in_specs=[
            pl.BlockSpec((n, hp), lambda i: (0, 0)),              # z (bf16, resident)
            pl.BlockSpec((num_heads, n), lambda i: (0, 0)),       # s_src (resident)
            pl.BlockSpec((tile_v, num_heads), lambda i: (i, 0)),  # s_dst dest tile
            pl.BlockSpec((tile_v, n), lambda i: (i, 0)),          # adjacency bias tile
        ],
        out_specs=pl.BlockSpec((tile_v, hp), lambda i: (i, 0)),
        compiler_params=pltpu.CompilerParams(
            dimension_semantics=("parallel",),
            vmem_limit_bytes=vmem_limit),
        cost_estimate=cost,
    )(z_bf, s_src, s_dst, bias)


def gat_forward(h, layer1_packed, layer2_packed, bias, out_dim):
    """GAT.forward: layer1 (multi-head, merge='cat') -> ELU -> layer2 (1 head)."""
    w1, as1, ad1 = layer1_packed
    # Layer-1 activations emitted in bf16: halves inter-layer HBM traffic and makes
    # layer 2's fc matmul bf16 full-rate.
    h1 = gat_layer_fused(h, w1, as1, ad1, bias, apply_elu=True,
                         out_dtype=jnp.bfloat16)               # (N, H*P1), ELU fused
    w2, as2, ad2 = layer2_packed
    out = gat_layer_fused(h1, w2, as2, ad2, bias, apply_elu=False,
                          out_dtype=jnp.float32)               # (N, P2)
    return out[:, :out_dim]


# ---------------------------------------------------------------------------
# Host-side parameter packing (lane-dense, 128-padded per head, bf16 weights)
# ---------------------------------------------------------------------------
def pack_layer1(heads, head_dim):
    pad = _round_up(head_dim, 128)
    n_heads = len(heads)
    in_dim = np.asarray(heads[0][0]).shape[0]
    w_all = np.zeros((in_dim, n_heads * pad), np.float32)
    a_src = np.zeros((n_heads, pad), np.float32)
    a_dst = np.zeros((n_heads, pad), np.float32)
    for i, (w, a) in enumerate(heads):
        w_all[:, i * pad:i * pad + head_dim] = np.asarray(w)
        a_src[i, :head_dim] = np.asarray(a[:head_dim])
        a_dst[i, :head_dim] = np.asarray(a[head_dim:])
    return (jnp.asarray(w_all, jnp.bfloat16), jnp.asarray(a_src),
            jnp.asarray(a_dst), pad)


def pack_layer2(w2, a2, in_heads, in_head_dim, in_head_pad, out_dim):
    pad = _round_up(out_dim, 128)
    w_phys = np.zeros((in_heads * in_head_pad, pad), np.float32)
    w2 = np.asarray(w2)
    for hd in range(in_heads):
        w_phys[hd * in_head_pad:hd * in_head_pad + in_head_dim, :out_dim] = \
            w2[hd * in_head_dim:(hd + 1) * in_head_dim, :]
    a2 = np.asarray(a2)
    a_src = np.zeros((1, pad), np.float32)
    a_dst = np.zeros((1, pad), np.float32)
    a_src[0, :out_dim] = a2[:out_dim]
    a_dst[0, :out_dim] = a2[out_dim:]
    return jnp.asarray(w_phys, jnp.bfloat16), jnp.asarray(a_src), jnp.asarray(a_dst)


# ---------------------------------------------------------------------------
# Pure-JAX reference (matches the PyTorch/DGL math in f32)
# ---------------------------------------------------------------------------
def _reference_layer(h, w, a, adj_in, apply_elu):
    z = h @ w
    d = w.shape[1]
    s_src = z @ a[:d]                       # (N,) applied to source z
    s_dst = z @ a[d:]                       # (N,) applied to destination z
    e = s_dst[:, None] + s_src[None, :]     # e[v, u]
    e = jnp.where(e > 0, e, 0.01 * e)
    e = jnp.where(adj_in > 0, e, -1e30)
    e = e - jnp.max(e, axis=1, keepdims=True)
    p = jnp.exp(e)
    alpha = p / jnp.sum(p, axis=1, keepdims=True)
    out = alpha @ z
    if apply_elu:
        out = jnp.where(out > 0, out, jnp.exp(out) - 1.0)
    return out


def _reference_forward(h, heads1, layer2, adj_in):
    outs = [_reference_layer(h, w, a, adj_in, False) for (w, a) in heads1]
    h1 = jnp.concatenate(outs, axis=1)
    h1 = jnp.where(h1 > 0, h1, jnp.exp(h1) - 1.0)   # F.elu after concat
    w2, a2 = layer2
    return _reference_layer(h1, w2, a2, adj_in, False)


def _init_head(key, in_dim, out_dim):
    k1, k2 = jax.random.split(key)
    w = 0.1 * jax.random.normal(k1, (in_dim, out_dim), jnp.float32)
    a = 0.1 * jax.random.normal(k2, (2 * out_dim,), jnp.float32)  # attn_fc weight
    return w, a


if __name__ == "__main__":
    # Ring graph with self-loops: every node has in-degree 3.
    N, IN_DIM, HIDDEN_DIM, OUT_DIM, NUM_HEADS = 256, 16, 16, 8, 2

    key = jax.random.PRNGKey(0)
    k_h, k_l1, k_l2 = jax.random.split(key, 3)

    h = jax.random.normal(k_h, (N, IN_DIM), jnp.float32)

    eye = jnp.eye(N, dtype=jnp.float32)
    # adj_in[v, u] = 1 iff edge u -> v  (self, left neighbor, right neighbor)
    adj_in = jnp.clip(eye + jnp.roll(eye, 1, axis=1) + jnp.roll(eye, -1, axis=1), 0.0, 1.0)
    # Additive attention-mask bias in bf16 (half the HBM traffic of f32 adj).
    bias = jnp.where(adj_in > 0, 0.0, -1e30).astype(jnp.bfloat16)

    heads1 = [_init_head(k, IN_DIM, HIDDEN_DIM) for k in jax.random.split(k_l1, NUM_HEADS)]
    w2, a2 = _init_head(k_l2, HIDDEN_DIM * NUM_HEADS, OUT_DIM)

    w1_all, a1_src, a1_dst, head_pad1 = pack_layer1(heads1, HIDDEN_DIM)
    w2_phys, a2_src, a2_dst = pack_layer2(w2, a2, NUM_HEADS, HIDDEN_DIM, head_pad1, OUT_DIM)

    fwd = jax.jit(functools.partial(gat_forward, out_dim=OUT_DIM))
    out = fwd(h, (w1_all, a1_src, a1_dst), (w2_phys, a2_src, a2_dst), bias)
    out = jax.block_until_ready(out)

    ref = _reference_forward(h, heads1, (w2, a2), adj_in)
    assert out.shape == (N, OUT_DIM), out.shape
    # bf16 weights/activations + bf16 MXU operands + approx reciprocal -> relaxed
    # tolerance vs the f32 reference.
    assert jnp.allclose(out, ref, rtol=2e-2, atol=2e-2), "mismatch vs reference"

    print("KERNEL_OK")
</pallas_src>

<mosaic_0001>
module attributes {stable_mosaic.version = 11 : i64} {
  func.func @_gat_attention_kernel(%arg0: i32, %arg1: memref<256x256xbf16, #tpu.memory_space<vmem>>, %arg2: memref<2x256xf32, #tpu.memory_space<vmem>>, %arg3: memref<128x2xf32, #tpu.memory_space<vmem>>, %arg4: memref<128x256xbf16, #tpu.memory_space<vmem>>, %arg5: memref<128x256xbf16, #tpu.memory_space<vmem>>) attributes {dimension_semantics = [#tpu.dimension_semantics<parallel>], iteration_bounds = array<i64: 2>, scalar_prefetch = 0 : i64, scratch_operands = 0 : i64, tpu.core_type = #tpu.core_type<tc>, window_params = [{pipeline_mode = #tpu.pipeline_mode<synchronous>, transform_indices = @transform_0, window_bounds = array<i64: 256, 256>}, {pipeline_mode = #tpu.pipeline_mode<synchronous>, transform_indices = @transform_1, window_bounds = array<i64: 2, 256>}, {transform_indices = @transform_2, window_bounds = array<i64: 128, 2>}, {transform_indices = @transform_3, window_bounds = array<i64: 128, 256>}, {transform_indices = @transform_4, window_bounds = array<i64: 128, 256>}]} {
    %c0 = arith.constant 0 : index
    %c0_0 = arith.constant 0 : index
    %0 = vector.load %arg4[%c0, %c0_0] : memref<128x256xbf16, #tpu.memory_space<vmem>>, vector<128x256xbf16>
    %1 = arith.extf %0 : vector<128x256xbf16> to vector<128x256xf32>
    %c0_1 = arith.constant 0 : index
    %c0_2 = arith.constant 0 : index
    %2 = vector.load %arg1[%c0_1, %c0_2] : memref<256x256xbf16, #tpu.memory_space<vmem>>, vector<256x128xbf16>
    %c0_3 = arith.constant 0 : index
    %c0_4 = arith.constant 0 : index
    %3 = vector.load %arg2[%c0_3, %c0_4] : memref<2x256xf32, #tpu.memory_space<vmem>>, vector<1x256xf32>
    %c0_5 = arith.constant 0 : index
    %c0_6 = arith.constant 0 : index
    %4 = vector.load %arg3[%c0_5, %c0_6] : memref<128x2xf32, #tpu.memory_space<vmem>>, vector<128x1xf32>
    %5 = vector.broadcast %4 : vector<128x1xf32> to vector<128x256xf32>
    %6 = vector.broadcast %3 : vector<1x256xf32> to vector<128x256xf32>
    %7 = arith.addf %5, %6 : vector<128x256xf32>
    %cst = arith.constant 0.00999999977 : f32
    %8 = vector.broadcast %cst : f32 to vector<128x256xf32>
    %9 = arith.mulf %8, %7 : vector<128x256xf32>
    %10 = arith.maximumf %7, %9 : vector<128x256xf32>
    %11 = arith.addf %10, %1 : vector<128x256xf32>
    %cst_7 = arith.constant dense<0xFF800000> : vector<128xf32>
    %12 = vector.multi_reduction <maximumf>, %11, %cst_7 [1] : vector<128x256xf32> to vector<128xf32>
    %13 = vector.shape_cast %12 : vector<128xf32> to vector<128x1xf32>
    %14 = vector.broadcast %13 : vector<128x1xf32> to vector<128x256xf32>
    %15 = arith.subf %11, %14 : vector<128x256xf32>
    %16 = math.exp %15 : vector<128x256xf32>
    %cst_8 = arith.constant dense<0.000000e+00> : vector<128xf32>
    %17 = vector.multi_reduction <add>, %16, %cst_8 [1] : vector<128x256xf32> to vector<128xf32>
    %18 = vector.shape_cast %17 : vector<128xf32> to vector<128x1xf32>
    %cst_9 = arith.constant 9.99999968E-21 : f32
    %19 = vector.broadcast %cst_9 : f32 to vector<128x1xf32>
    %20 = arith.maximumf %18, %19 : vector<128x1xf32>
    %21 = arith.truncf %16 : vector<128x256xf32> to vector<128x256xbf16>
    %cst_10 = arith.constant dense<0.000000e+00> : vector<128x128xf32>
    %22 = tpu.matmul %21, %2, %cst_10 {dimension_numbers = #tpu.dot_dimension_numbers<[1], [0], [0], [1], [0, 0, 1, 1], [], []>} : vector<128x256xbf16>, vector<256x128xbf16>, vector<128x128xf32> -> vector<128x128xf32>
    %23 = tpu.reciprocal %20 {approx = true} : vector<128x1xf32> -> vector<128x1xf32>
    %24 = vector.broadcast %23 : vector<128x1xf32> to vector<128x128xf32>
    %25 = arith.mulf %22, %24 : vector<128x128xf32>
    %cst_11 = arith.constant 0.000000e+00 : f32
    %26 = vector.broadcast %cst_11 : f32 to vector<128x128xf32>
    %27 = arith.cmpf ogt, %25, %26 : vector<128x128xf32>
    %cst_12 = arith.constant 0.000000e+00 : f32
    %28 = vector.broadcast %cst_12 : f32 to vector<128x128xf32>
    %29 = arith.minimumf %25, %28 : vector<128x128xf32>
    %30 = math.exp %29 : vector<128x128xf32>
    %cst_13 = arith.constant 1.000000e+00 : f32
    %31 = vector.broadcast %cst_13 : f32 to vector<128x128xf32>
    %32 = arith.subf %30, %31 : vector<128x128xf32>
    %33 = arith.select %27, %25, %32 : vector<128x128xi1>, vector<128x128xf32>
    %34 = arith.truncf %33 : vector<128x128xf32> to vector<128x128xbf16>
    %c0_14 = arith.constant 0 : index
    %c0_15 = arith.constant 0 : index
    %35 = vector.load %arg5[%c0_14, %c0_15] : memref<128x256xbf16, #tpu.memory_space<vmem>>, vector<128x128xbf16>
    tpu.vector_store %arg5[%c0_14, %c0_15], %34 {strides = array<i32>} : memref<128x256xbf16, #tpu.memory_space<vmem>>, vector<128x128xbf16>,
    %c0_16 = arith.constant 0 : index
    %c128 = arith.constant 128 : index
    %36 = vector.load %arg1[%c0_16, %c128] : memref<256x256xbf16, #tpu.memory_space<vmem>>, vector<256x128xbf16>
    %c1 = arith.constant 1 : index
    %c0_17 = arith.constant 0 : index
    %37 = vector.load %arg2[%c1, %c0_17] : memref<2x256xf32, #tpu.memory_space<vmem>>, vector<1x256xf32>
    %c0_18 = arith.constant 0 : index
    %c1_19 = arith.constant 1 : index
    %38 = vector.load %arg3[%c0_18, %c1_19] : memref<128x2xf32, #tpu.memory_space<vmem>>, vector<128x1xf32>
    %39 = vector.broadcast %38 : vector<128x1xf32> to vector<128x256xf32>
    %40 = vector.broadcast %37 : vector<1x256xf32> to vector<128x256xf32>
    %41 = arith.addf %39, %40 : vector<128x256xf32>
    %cst_20 = arith.constant 0.00999999977 : f32
    %42 = vector.broadcast %cst_20 : f32 to vector<128x256xf32>
    %43 = arith.mulf %42, %41 : vector<128x256xf32>
    %44 = arith.maximumf %41, %43 : vector<128x256xf32>
    %45 = arith.addf %44, %1 : vector<128x256xf32>
    %cst_21 = arith.constant dense<0xFF800000> : vector<128xf32>
    %46 = vector.multi_reduction <maximumf>, %45, %cst_21 [1] : vector<128x256xf32> to vector<128xf32>
    %47 = vector.shape_cast %46 : vector<128xf32> to vector<128x1xf32>
    %48 = vector.broadcast %47 : vector<128x1xf32> to vector<128x256xf32>
    %49 = arith.subf %45, %48 : vector<128x256xf32>
    %50 = math.exp %49 : vector<128x256xf32>
    %cst_22 = arith.constant dense<0.000000e+00> : vector<128xf32>
    %51 = vector.multi_reduction <add>, %50, %cst_22 [1] : vector<128x256xf32> to vector<128xf32>
    %52 = vector.shape_cast %51 : vector<128xf32> to vector<128x1xf32>
    %cst_23 = arith.constant 9.99999968E-21 : f32
    %53 = vector.broadcast %cst_23 : f32 to vector<128x1xf32>
    %54 = arith.maximumf %52, %53 : vector<128x1xf32>
    %55 = arith.truncf %50 : vector<128x256xf32> to vector<128x256xbf16>
    %cst_24 = arith.constant dense<0.000000e+00> : vector<128x128xf32>
    %56 = tpu.matmul %55, %36, %cst_24 {dimension_numbers = #tpu.dot_dimension_numbers<[1], [0], [0], [1], [0, 0, 1, 1], [], []>} : vector<128x256xbf16>, vector<256x128xbf16>, vector<128x128xf32> -> vector<128x128xf32>
    %57 = tpu.reciprocal %54 {approx = true} : vector<128x1xf32> -> vector<128x1xf32>
    %58 = vector.broadcast %57 : vector<128x1xf32> to vector<128x128xf32>
    %59 = arith.mulf %56, %58 : vector<128x128xf32>
    %cst_25 = arith.constant 0.000000e+00 : f32
    %60 = vector.broadcast %cst_25 : f32 to vector<128x128xf32>
    %61 = arith.cmpf ogt, %59, %60 : vector<128x128xf32>
    %cst_26 = arith.constant 0.000000e+00 : f32
    %62 = vector.broadcast %cst_26 : f32 to vector<128x128xf32>
    %63 = arith.minimumf %59, %62 : vector<128x128xf32>
    %64 = math.exp %63 : vector<128x128xf32>
    %cst_27 = arith.constant 1.000000e+00 : f32
    %65 = vector.broadcast %cst_27 : f32 to vector<128x128xf32>
    %66 = arith.subf %64, %65 : vector<128x128xf32>
    %67 = arith.select %61, %59, %66 : vector<128x128xi1>, vector<128x128xf32>
    %68 = arith.truncf %67 : vector<128x128xf32> to vector<128x128xbf16>
    %c0_28 = arith.constant 0 : index
    %c128_29 = arith.constant 128 : index
    %69 = vector.load %arg5[%c0_28, %c128_29] : memref<128x256xbf16, #tpu.memory_space<vmem>>, vector<128x128xbf16>
    tpu.vector_store %arg5[%c0_28, %c128_29], %68 {strides = array<i32>} : memref<128x256xbf16, #tpu.memory_space<vmem>>, vector<128x128xbf16>,
    return
  }
  func.func @transform_0(%arg0: i32) -> (i32, i32) {
    %c0_i32 = arith.constant 0 : i32
    %c0_i32_0 = arith.constant 0 : i32
    %c0_i32_1 = arith.constant 0 : i32
    return %c0_i32, %c0_i32_0 : i32, i32
  }
  func.func @transform_1(%arg0: i32) -> (i32, i32) {
    %c0_i32 = arith.constant 0 : i32
    %c0_i32_0 = arith.constant 0 : i32
    %c0_i32_1 = arith.constant 0 : i32
    return %c0_i32, %c0_i32_0 : i32, i32
  }
  func.func @transform_2(%arg0: i32) -> (i32, i32) {
    %c0_i32 = arith.constant 0 : i32
    %c0_i32_0 = arith.constant 0 : i32
    return %arg0, %c0_i32 : i32, i32
  }
  func.func @transform_3(%arg0: i32) -> (i32, i32) {
    %c0_i32 = arith.constant 0 : i32
    %c0_i32_0 = arith.constant 0 : i32
    return %arg0, %c0_i32 : i32, i32
  }
  func.func @transform_4(%arg0: i32) -> (i32, i32) {
    %c0_i32 = arith.constant 0 : i32
    %c0_i32_0 = arith.constant 0 : i32
    return %arg0, %c0_i32 : i32, i32
  }
}

module attributes {stable_mosaic.version = 11 : i64} {
  func.func @_gat_attention_kernel(%arg0: i32, %arg1: memref<256x128xbf16, #tpu.memory_space<vmem>>, %arg2: memref<1x256xf32, #tpu.memory_space<vmem>>, %arg3: memref<128x1xf32, #tpu.memory_space<vmem>>, %arg4: memref<128x256xbf16, #tpu.memory_space<vmem>>, %arg5: memref<128x128xf32, #tpu.memory_space<vmem>>) attributes {dimension_semantics = [#tpu.dimension_semantics<parallel>], iteration_bounds = array<i64: 2>, scalar_prefetch = 0 : i64, scratch_operands = 0 : i64, tpu.core_type = #tpu.core_type<tc>, window_params = [{pipeline_mode = #tpu.pipeline_mode<synchronous>, transform_indices = @transform_0, window_bounds = array<i64: 256, 128>}, {pipeline_mode = #tpu.pipeline_mode<synchronous>, transform_indices = @transform_1, window_bounds = array<i64: 1, 256>}, {transform_indices = @transform_2, window_bounds = array<i64: 128, 1>}, {transform_indices = @transform_3, window_bounds = array<i64: 128, 256>}, {transform_indices = @transform_4, window_bounds = array<i64: 128, 128>}]} {
    %c0 = arith.constant 0 : index
    %c0_0 = arith.constant 0 : index
    %0 = vector.load %arg4[%c0, %c0_0] : memref<128x256xbf16, #tpu.memory_space<vmem>>, vector<128x256xbf16>
    %1 = arith.extf %0 : vector<128x256xbf16> to vector<128x256xf32>
    %c0_1 = arith.constant 0 : index
    %c0_2 = arith.constant 0 : index
    %2 = vector.load %arg1[%c0_1, %c0_2] : memref<256x128xbf16, #tpu.memory_space<vmem>>, vector<256x128xbf16>
    %c0_3 = arith.constant 0 : index
    %c0_4 = arith.constant 0 : index
    %3 = vector.load %arg2[%c0_3, %c0_4] : memref<1x256xf32, #tpu.memory_space<vmem>>, vector<1x256xf32>
    %c0_5 = arith.constant 0 : index
    %c0_6 = arith.constant 0 : index
    %4 = vector.load %arg3[%c0_5, %c0_6] : memref<128x1xf32, #tpu.memory_space<vmem>>, vector<128x1xf32>
    %5 = vector.broadcast %4 : vector<128x1xf32> to vector<128x256xf32>
    %6 = vector.broadcast %3 : vector<1x256xf32> to vector<128x256xf32>
    %7 = arith.addf %5, %6 : vector<128x256xf32>
    %cst = arith.constant 0.00999999977 : f32
    %8 = vector.broadcast %cst : f32 to vector<128x256xf32>
    %9 = arith.mulf %8, %7 : vector<128x256xf32>
    %10 = arith.maximumf %7, %9 : vector<128x256xf32>
    %11 = arith.addf %10, %1 : vector<128x256xf32>
    %cst_7 = arith.constant dense<0xFF800000> : vector<128xf32>
    %12 = vector.multi_reduction <maximumf>, %11, %cst_7 [1] : vector<128x256xf32> to vector<128xf32>
    %13 = vector.shape_cast %12 : vector<128xf32> to vector<128x1xf32>
    %14 = vector.broadcast %13 : vector<128x1xf32> to vector<128x256xf32>
    %15 = arith.subf %11, %14 : vector<128x256xf32>
    %16 = math.exp %15 : vector<128x256xf32>
    %cst_8 = arith.constant dense<0.000000e+00> : vector<128xf32>
    %17 = vector.multi_reduction <add>, %16, %cst_8 [1] : vector<128x256xf32> to vector<128xf32>
    %18 = vector.shape_cast %17 : vector<128xf32> to vector<128x1xf32>
    %cst_9 = arith.constant 9.99999968E-21 : f32
    %19 = vector.broadcast %cst_9 : f32 to vector<128x1xf32>
    %20 = arith.maximumf %18, %19 : vector<128x1xf32>
    %21 = arith.truncf %16 : vector<128x256xf32> to vector<128x256xbf16>
    %cst_10 = arith.constant dense<0.000000e+00> : vector<128x128xf32>
    %22 = tpu.matmul %21, %2, %cst_10 {dimension_numbers = #tpu.dot_dimension_numbers<[1], [0], [0], [1], [0, 0, 1, 1], [], []>} : vector<128x256xbf16>, vector<256x128xbf16>, vector<128x128xf32> -> vector<128x128xf32>
    %23 = tpu.reciprocal %20 {approx = true} : vector<128x1xf32> -> vector<128x1xf32>
    %24 = vector.broadcast %23 : vector<128x1xf32> to vector<128x128xf32>
    %25 = arith.mulf %22, %24 : vector<128x128xf32>
    %c0_11 = arith.constant 0 : index
    %c0_12 = arith.constant 0 : index
    %26 = vector.load %arg5[%c0_11, %c0_12] : memref<128x128xf32, #tpu.memory_space<vmem>>, vector<128x128xf32>
    tpu.vector_store %arg5[%c0_11, %c0_12], %25 {strides = array<i32>} : memref<128x128xf32, #tpu.memory_space<vmem>>, vector<128x128xf32>,
    return
  }
  func.func @transform_0(%arg0: i32) -> (i32, i32) {
    %c0_i32 = arith.constant 0 : i32
    %c0_i32_0 = arith.constant 0 : i32
    %c0_i32_1 = arith.constant 0 : i32
    return %c0_i32, %c0_i32_0 : i32, i32
  }
  func.func @transform_1(%arg0: i32) -> (i32, i32) {
    %c0_i32 = arith.constant 0 : i32
    %c0_i32_0 = arith.constant 0 : i32
    %c0_i32_1 = arith.constant 0 : i32
    return %c0_i32, %c0_i32_0 : i32, i32
  }
  func.func @transform_2(%arg0: i32) -> (i32, i32) {
    %c0_i32 = arith.constant 0 : i32
    %c0_i32_0 = arith.constant 0 : i32
    return %arg0, %c0_i32 : i32, i32
  }
  func.func @transform_3(%arg0: i32) -> (i32, i32) {
    %c0_i32 = arith.constant 0 : i32
    %c0_i32_0 = arith.constant 0 : i32
    return %arg0, %c0_i32 : i32, i32
  }
  func.func @transform_4(%arg0: i32) -> (i32, i32) {
    %c0_i32 = arith.constant 0 : i32
    %c0_i32_0 = arith.constant 0 : i32
    return %arg0, %c0_i32 : i32, i32
  }
}

</mosaic_0001>

<llo_original>
// kernel: gat_forward.3
$region0: #{gat_forward.3}
  #allocation0 [shape = 'u32[]', space=smem, size = 0x4, offset = 0x4, fixed_abs, tag = 'smem constant byte address 0x4 - core index']
  #allocation1 [shape = 'u32[144,128]{1,0:T(1,128)}', space=vmem, size = 0x12000, scoped, tag = 'internal scratch']
  %s0 = inlined_call_operand.vmem [shape: bf16[256,128], index: 0, kind: input, shape index: {}]
  %s1 = inlined_call_operand.vmem [shape: f32[1,256], index: 1, kind: input, shape index: {}]
  %s2 = inlined_call_operand.vmem [shape: f32[256,1], index: 2, kind: input, shape index: {}]
  %s3 = inlined_call_operand.vmem [shape: bf16[256,256], index: 3, kind: input, shape index: {}]
  %s4 = inlined_call_operand.vmem [shape: f32[256,128], index: 4, kind: output, shape index: {}]
  %s5 = sld [smem:[#allocation0]]
  $region49: #{gat_forward.3} parent=0
    _
  %s7 = ssub.s32 1, %s5
  %s8 = scalar_select 0, %s7, %s5
  loop: start=0, step=1, limit=4
  $region2: #{gat_forward.3} parent=0 // loop_pre_header
    _
  $region3: #{gat_forward.3} parent=0 // loop_header
    %s10 = sphi 0, %s14
    %p11 = scmp.ge.s32.totalorder %s10, 4
    %s18 = sphi 0, %s18
    %s20 = sphi 0, %s18
    %s21 = sphi 0, %s20
    %s35 = sphi 0, %s21
    %s39 = sphi 0, %s39
    %s41 = sphi 0, %s39
    %s42 = sphi 0, %s41
    %s56 = sphi 0, %s42
    %s62 = sphi 0, %s64
    %s65 = sphi 0, %s62
    %s66 = sphi 0, %s65
    %s82 = sphi 0, %s66
    %s88 = sphi 0, %s90
    %s91 = sphi 0, %s88
    %s92 = sphi 0, %s91
    %s108 = sphi 0, %s92
    %s114 = sphi 0, %s116
    %s117 = sphi 0, %s114
    %s118 = sphi 0, %s117
    %s134 = sphi 0, %s118
  $region4: #{gat_forward.3} parent=0 // loop_header_branch
    %13 = sbr.rel (%p11) target = $region8
  $region5: #{gat_forward.3} parent=0 // loop_body
    %s15 = ssub.s32 %s10, 1
    %s16 = ssub.s32 %s10, 2
    %s17 = sadd.s32 %s10, 1
    %s19 = sadd.s32 %s18, 1
    %p22 = scmp.eq.s32.totalorder %s10, 1
    %p23 = scmp.ne.s32.totalorder %s18, %s20
    %p24 = scmp.eq.s32.totalorder %s10, 0
    %p25 = por %p23, %p24
    %p26 = scmp.ne.s32.totalorder %s18, %s20
    %p27 = scmp.eq.s32.totalorder %s15, 1
    %p28 = por %p26, %p27
    %p29 = scmp.ne.s32.totalorder %s20, %s21
    %p30 = scmp.eq.s32.totalorder %s15, 0
    %p31 = por %p29, %p30
    %p32 = scmp.ne.s32.totalorder %s20, %s21
    %p33 = scmp.eq.s32.totalorder %s16, 1
    %p34 = por %p32, %p33
    %p36 = scmp.ne.s32.totalorder %s21, %s35
    %p37 = scmp.eq.s32.totalorder %s16, 0
    %p38 = por %p36, %p37
    %s40 = sadd.s32 %s39, 1
    %p43 = scmp.eq.s32.totalorder %s10, 1
    %p44 = scmp.ne.s32.totalorder %s39, %s41
    %p45 = scmp.eq.s32.totalorder %s10, 0
    %p46 = por %p44, %p45
    %p47 = scmp.ne.s32.totalorder %s39, %s41
    %p48 = scmp.eq.s32.totalorder %s15, 1
    %p49 = por %p47, %p48
    %p50 = scmp.ne.s32.totalorder %s41, %s42
    %p51 = scmp.eq.s32.totalorder %s15, 0
    %p52 = por %p50, %p51
    %p53 = scmp.ne.s32.totalorder %s41, %s42
    %p54 = scmp.eq.s32.totalorder %s16, 1
    %p55 = por %p53, %p54
    %p57 = scmp.ne.s32.totalorder %s42, %s56
    %p58 = scmp.eq.s32.totalorder %s16, 0
    %p59 = por %p57, %p58
    %s60 = ssub.s32 %s10, %s17
    %p61 = scmp.eq.s32.totalorder %s60, 0
    %s63 = sadd.s32 %s62, 1
    %s64 = scalar_select %p61, %s62, %s63
    %p67 = pneg %p61
    %p68 = scmp.eq.s32.totalorder %s10, 1
    %p69 = por %p67, %p68
    %p70 = scmp.ne.s32.totalorder %s62, %s65
    %p71 = scmp.eq.s32.totalorder %s10, 0
    %p72 = por %p70, %p71
    %p73 = scmp.ne.s32.totalorder %s62, %s65
    %p74 = scmp.eq.s32.totalorder %s15, 1
    %p75 = por %p73, %p74
    %p76 = scmp.ne.s32.totalorder %s65, %s66
    %p77 = scmp.eq.s32.totalorder %s15, 0
    %p78 = por %p76, %p77
    %p79 = scmp.ne.s32.totalorder %s65, %s66
    %p80 = scmp.eq.s32.totalorder %s16, 1
    %p81 = por %p79, %p80
    %p83 = scmp.ne.s32.totalorder %s66, %s82
    %p84 = scmp.eq.s32.totalorder %s16, 0
    %p85 = por %p83, %p84
    %s86 = ssub.s32 %s10, %s17
    %p87 = scmp.eq.s32.totalorder %s86, 0
    %s89 = sadd.s32 %s88, 1
    %s90 = scalar_select %p87, %s88, %s89
    %p93 = pneg %p87
    %p94 = scmp.eq.s32.totalorder %s10, 1
    %p95 = por %p93, %p94
    %p96 = scmp.ne.s32.totalorder %s88, %s91
    %p97 = scmp.eq.s32.totalorder %s10, 0
    %p98 = por %p96, %p97
    %p99 = scmp.ne.s32.totalorder %s88, %s91
    %p100 = scmp.eq.s32.totalorder %s15, 1
    %p101 = por %p99, %p100
    %p102 = scmp.ne.s32.totalorder %s91, %s92
    %p103 = scmp.eq.s32.totalorder %s15, 0
    %p104 = por %p102, %p103
    %p105 = scmp.ne.s32.totalorder %s91, %s92
    %p106 = scmp.eq.s32.totalorder %s16, 1
    %p107 = por %p105, %p106
    %p109 = scmp.ne.s32.totalorder %s92, %s108
    %p110 = scmp.eq.s32.totalorder %s16, 0
    %p111 = por %p109, %p110
    %s112 = ssub.s32 %s10, %s17
    %p113 = scmp.eq.s32.totalorder %s112, 0
    %s115 = sadd.s32 %s114, 1
    %s116 = scalar_select %p113, %s114, %s115
    %p119 = pneg %p113
    %p120 = scmp.eq.s32.totalorder %s10, 1
    %p121 = por %p119, %p120
    %p122 = scmp.ne.s32.totalorder %s114, %s117
    %p123 = scmp.eq.s32.totalorder %s10, 0
    %p124 = por %p122, %p123
    %p125 = scmp.ne.s32.totalorder %s114, %s117
    %p126 = scmp.eq.s32.totalorder %s15, 1
    %p127 = por %p125, %p126
    %p128 = scmp.ne.s32.totalorder %s117, %s118
    %p129 = scmp.eq.s32.totalorder %s15, 0
    %p130 = por %p128, %p129
    %p131 = scmp.ne.s32.totalorder %s117, %s118
    %p132 = scmp.eq.s32.totalorder %s16, 1
    %p133 = por %p131, %p132
    %p135 = scmp.ne.s32.totalorder %s118, %s134
    %p136 = scmp.eq.s32.totalorder %s16, 0
    %p137 = por %p135, %p136
    %p138 = scmp.le.s32.totalorder 1, %s10
    %p139 = scmp.lt.s32.totalorder %s10, 3
    %p140 = pnand %p138, %p139
    %p141 = pneg %p140
    // Predicated region
    $region9: #{gat_forward.3} parent=5 // pred_check
      _
    $region10: #{gat_forward.3} parent=5 // pred_check_branch
      %143 = sbr.rel (%p140) target = $region12
    $region11: #{gat_forward.3} parent=5 // pred_region
      %s144 = ssub.s32 %s10, 1
      // Predicated region
      $region13: #{gat_forward.3} parent=11 // pred_check
        %p145 = pneg %p31
      $region14: #{gat_forward.3} parent=11 // pred_check_branch
        %147 = sbr.rel (%p145) target = $region16
      $region15: #{gat_forward.3} parent=11 // pred_region
        _
      $region16: #{gat_forward.3} parent=11 // pred_fallthru
        _
      // Predicated region
      $region17: #{gat_forward.3} parent=11 // pred_check
        %p148 = pneg %p52
      $region18: #{gat_forward.3} parent=11 // pred_check_branch
        %150 = sbr.rel (%p148) target = $region20
      $region19: #{gat_forward.3} parent=11 // pred_region
        _
      $region20: #{gat_forward.3} parent=11 // pred_fallthru
        _
    $region12: #{gat_forward.3} parent=5 // pred_fallthru
      _
    %p151 = scmp.lt.s32.totalorder %s10, 2
    // Predicated region
    $region21: #{gat_forward.3} parent=5 // pred_check
      %p152 = pneg %p151
    $region22: #{gat_forward.3} parent=5 // pred_check_branch
      %154 = sbr.rel (%p152) target = $region24
    $region23: #{gat_forward.3} parent=5 // pred_region
      // Predicated region
      $region25: #{gat_forward.3} parent=23 // pred_check
        %p155 = pneg %p72
      $region26: #{gat_forward.3} parent=23 // pred_check_branch
        %157 = sbr.rel (%p155) target = $region28
      $region27: #{gat_forward.3} parent=23 // pred_region
        %s158 = smul.u32 16, %s10
        %p159 = scmp.lt.s32.totalorder %s158, 31
        %s160 = scalar_select %p159, %s158, 31
        %s161 = smul.addr %s160, 8
        %s162 = scalar_lea.vmem %s2, %s161
        %s163 = smul.u32 16, %s10
      $region28: #{gat_forward.3} parent=23 // pred_fallthru
        _
      // Predicated region
      $region29: #{gat_forward.3} parent=23 // pred_check
        %p164 = pneg %p98
      $region30: #{gat_forward.3} parent=23 // pred_check_branch
        %166 = sbr.rel (%p164) target = $region32
      $region31: #{gat_forward.3} parent=23 // pred_region
        %s167 = smul.u32 16, %s10
        %p168 = scmp.lt.s32.totalorder %s167, 31
        %s169 = scalar_select %p168, %s167, 31
        %s170 = smul.addr %s169, 2
        %s171 = smul.addr %s170, 4
        %s172 = scalar_lea.vmem %s3, %s171
        %s173 = smul.u32 16, %s10
      $region32: #{gat_forward.3} parent=23 // pred_fallthru
        _
    $region24: #{gat_forward.3} parent=5 // pred_fallthru
      _
    %p174 = scmp.le.s32.totalorder 1, %s10
    %p175 = scmp.lt.s32.totalorder %s10, 3
    %p176 = pnand %p174, %p175
    %p177 = pneg %p176
    // Predicated region
    $region33: #{gat_forward.3} parent=5 // pred_check
      _
    $region34: #{gat_forward.3} parent=5 // pred_check_branch
      %179 = sbr.rel (%p176) target = $region36
    $region35: #{gat_forward.3} parent=5 // pred_region
      %s180 = ssub.s32 %s10, 1
      %p181 = pneg %p31
      %p182 = pneg %p28
      %p183 = pneg %p52
      %p184 = pneg %p49
      %s185 = smul.u32 16, %s15
      %p186 = scmp.lt.s32.totalorder %s185, 31
      %s187 = scalar_select %p186, %s185, 31
      %s188 = smul.addr %s187, 8
      %s189 = scalar_lea.vmem %s2, %s188
      %p190 = pneg %p78
      %p191 = pneg %p75
      %s192 = smul.u32 16, %s15
      %p193 = scmp.lt.s32.totalorder %s192, 31
      %s194 = scalar_select %p193, %s192, 31
      %s195 = smul.addr %s194, 2
      %s196 = smul.addr %s195, 4
      %s197 = scalar_lea.vmem %s3, %s196
      %p198 = pneg %p104
      %p199 = pneg %p101
      %p200 = pneg %p130
      %p201 = pneg %p127
      %s202 = smul.u32 16, %s15
      %p203 = scmp.lt.s32.totalorder %s202, 31
      %s204 = scalar_select %p203, %s202, 31
      %s205 = smul.addr %s204, 8
      %s206 = scalar_lea.vmem %s4, %s205
      %s207 = smul.u32 16, %s15
      %p208 = scmp.lt.s32.totalorder %s207, 31
      %s209 = scalar_select %p208, %s207, 31
      %s210 = smul.addr %s209, 8
      %s211 = scalar_lea.vmem %s2, %s210
      %s212 = smul.u32 16, %s15
      %s213 = smul.u32 16, %s15
      %p214 = scmp.lt.s32.totalorder %s213, 31
      %s215 = scalar_select %p214, %s213, 31
      %s216 = smul.addr %s215, 2
      %s217 = smul.addr %s216, 4
      %s218 = scalar_lea.vmem %s3, %s217
      %s219 = smul.u32 16, %s15
      %s220 = smul.u32 16, %s15
      %p221 = scmp.lt.s32.totalorder %s220, 31
      %s222 = scalar_select %p221, %s220, 31
      %s223 = smul.addr %s222, 8
      %s224 = scalar_lea.vmem %s4, %s223
      %s225 = smul.u32 16, %s15
      %v227 = vld [vmem:[%s218] sm:$0xff]
      %v228 = vld [vmem:[%s218 + $0x8] sm:$0xff]
      %v229 = vld [vmem:[%s218 + $0x10] sm:$0xff]
      %v230 = vld [vmem:[%s218 + $0x18] sm:$0xff]
      %v231 = vld [vmem:[%s218 + $0x20] sm:$0xff]
      %v232 = vld [vmem:[%s218 + $0x28] sm:$0xff]
      %v233 = vld [vmem:[%s218 + $0x30] sm:$0xff]
      %v234 = vld [vmem:[%s218 + $0x38] sm:$0xff]
      %v235 = vld [vmem:[%s218 + $0x40] sm:$0xff]
      %v236 = vld [vmem:[%s218 + $0x48] sm:$0xff]
      %v237 = vld [vmem:[%s218 + $0x50] sm:$0xff]
      %v238 = vld [vmem:[%s218 + $0x58] sm:$0xff]
      %v239 = vld [vmem:[%s218 + $0x60] sm:$0xff]
      %v240 = vld [vmem:[%s218 + $0x68] sm:$0xff]
      %v241 = vld [vmem:[%s218 + $0x70] sm:$0xff]
      %v242 = vld [vmem:[%s218 + $0x78] sm:$0xff]
      %v243 = vunpack.c.l.bf16 %v227
      %v244 = vunpack.c.h.bf16 %v227
      %v245 = vunpack.c.l.bf16 %v228
      %v246 = vunpack.c.h.bf16 %v228
      %v247 = vunpack.c.l.bf16 %v229
      %v248 = vunpack.c.h.bf16 %v229
      %v249 = vunpack.c.l.bf16 %v230
      %v250 = vunpack.c.h.bf16 %v230
      %v251 = vunpack.c.l.bf16 %v231
      %v252 = vunpack.c.h.bf16 %v231
      %v253 = vunpack.c.l.bf16 %v232
      %v254 = vunpack.c.h.bf16 %v232
      %v255 = vunpack.c.l.bf16 %v233
      %v256 = vunpack.c.h.bf16 %v233
      %v257 = vunpack.c.l.bf16 %v234
      %v258 = vunpack.c.h.bf16 %v234
      %v259 = vunpack.c.l.bf16 %v235
      %v260 = vunpack.c.h.bf16 %v235
      %v261 = vunpack.c.l.bf16 %v236
      %v262 = vunpack.c.h.bf16 %v236
      %v263 = vunpack.c.l.bf16 %v237
      %v264 = vunpack.c.h.bf16 %v237
      %v265 = vunpack.c.l.bf16 %v238
      %v266 = vunpack.c.h.bf16 %v238
      %v267 = vunpack.c.l.bf16 %v239
      %v268 = vunpack.c.h.bf16 %v239
      %v269 = vunpack.c.l.bf16 %v240
      %v270 = vunpack.c.h.bf16 %v240
      %v271 = vunpack.c.l.bf16 %v241
      %v272 = vunpack.c.h.bf16 %v241
      %v273 = vunpack.c.l.bf16 %v242
      %v274 = vunpack.c.h.bf16 %v242
      %v275 = vld [vmem:[%s0] sm:$0xf]
      %v276 = vld [vmem:[%s0 + $0x4] sm:$0xf]
      %v277 = vld [vmem:[%s0 + $0x8] sm:$0xf]
      %v278 = vld [vmem:[%s0 + $0xc] sm:$0xf]
      %v279 = vld [vmem:[%s0 + $0x10] sm:$0xf]
      %v280 = vld [vmem:[%s0 + $0x14] sm:$0xf]
      %v281 = vld [vmem:[%s0 + $0x18] sm:$0xf]
      %v282 = vld [vmem:[%s0 + $0x1c] sm:$0xf]
      %v283 = vld [vmem:[%s0 + $0x20] sm:$0xf]
      %v284 = vld [vmem:[%s0 + $0x24] sm:$0xf]
      %v285 = vld [vmem:[%s0 + $0x28] sm:$0xf]
      %v286 = vld [vmem:[%s0 + $0x2c] sm:$0xf]
      %v287 = vld [vmem:[%s0 + $0x30] sm:$0xf]
      %v288 = vld [vmem:[%s0 + $0x34] sm:$0xf]
      %v289 = vld [vmem:[%s0 + $0x38] sm:$0xf]
      %v290 = vld [vmem:[%s0 + $0x3c] sm:$0xf]
      %v291 = vld [vmem:[%s0 + $0x40] sm:$0xf]
      %v292 = vld [vmem:[%s0 + $0x44] sm:$0xf]
      %v293 = vld [vmem:[%s0 + $0x48] sm:$0xf]
      %v294 = vld [vmem:[%s0 + $0x4c] sm:$0xf]
      %v295 = vld [vmem:[%s0 + $0x50] sm:$0xf]
      %v296 = vld [vmem:[%s0 + $0x54] sm:$0xf]
      %v297 = vld [vmem:[%s0 + $0x58] sm:$0xf]
      %v298 = vld [vmem:[%s0 + $0x5c] sm:$0xf]
      %v299 = vld [vmem:[%s0 + $0x60] sm:$0xf]
      %v300 = vld [vmem:[%s0 + $0x64] sm:$0xf]
      %v301 = vld [vmem:[%s0 + $0x68] sm:$0xf]
      %v302 = vld [vmem:[%s0 + $0x6c] sm:$0xf]
      %v303 = vld [vmem:[%s0 + $0x70] sm:$0xf]
      %v304 = vld [vmem:[%s0 + $0x74] sm:$0xf]
      %v305 = vld [vmem:[%s0 + $0x78] sm:$0xf]
      %v306 = vld [vmem:[%s0 + $0x7c] sm:$0xf]
      %v307 = vld [vmem:[%s1] sm:$0x3]
      %v308 = vld [vmem:[%s211] sm:$0xff]
      %v309 = vld [vmem:[%s211 + $0x8] sm:$0xff]
      %v310 = vld [vmem:[%s211 + $0x10] sm:$0xff]
      %v311 = vld [vmem:[%s211 + $0x18] sm:$0xff]
      %v312 = vld [vmem:[%s211 + $0x20] sm:$0xff]
      %v313 = vld [vmem:[%s211 + $0x28] sm:$0xff]
      %v314 = vld [vmem:[%s211 + $0x30] sm:$0xff]
      %v315 = vld [vmem:[%s211 + $0x38] sm:$0xff]
      %v316 = vld [vmem:[%s211 + $0x40] sm:$0xff]
      %v317 = vld [vmem:[%s211 + $0x48] sm:$0xff]
      %v318 = vld [vmem:[%s211 + $0x50] sm:$0xff]
      %v319 = vld [vmem:[%s211 + $0x58] sm:$0xff]
      %v320 = vld [vmem:[%s211 + $0x60] sm:$0xff]
      %v321 = vld [vmem:[%s211 + $0x68] sm:$0xff]
      %v322 = vld [vmem:[%s211 + $0x70] sm:$0xff]
      %v323 = vld [vmem:[%s211 + $0x78] sm:$0xff]
      %325 = vset.pattern.permute.xlu0 0
      %326 = vperm.xlu0 %325, %v308
      %v327 = vpop.permute.xlu0 %326
      %330 = vset.pattern.permute.xlu0 0
      %331 = vperm.xlu0 %330, %v309
      %v332 = vpop.permute.xlu0 %331
      %335 = vset.pattern.permute.xlu0 0
      %336 = vperm.xlu0 %335, %v310
      %v337 = vpop.permute.xlu0 %336
      %340 = vset.pattern.permute.xlu0 0
      %341 = vperm.xlu0 %340, %v311
      %v342 = vpop.permute.xlu0 %341
      %345 = vset.pattern.permute.xlu0 0
      %346 = vperm.xlu0 %345, %v312
      %v347 = vpop.permute.xlu0 %346
      %350 = vset.pattern.permute.xlu0 0
      %351 = vperm.xlu0 %350, %v313
      %v352 = vpop.permute.xlu0 %351
      %355 = vset.pattern.permute.xlu0 0
      %356 = vperm.xlu0 %355, %v314
      %v357 = vpop.permute.xlu0 %356
      %360 = vset.pattern.permute.xlu0 0
      %361 = vperm.xlu0 %360, %v315
      %v362 = vpop.permute.xlu0 %361
      %365 = vset.pattern.permute.xlu0 0
      %366 = vperm.xlu0 %365, %v316
      %v367 = vpop.permute.xlu0 %366
      %370 = vset.pattern.permute.xlu0 0
      %371 = vperm.xlu0 %370, %v317
      %v372 = vpop.permute.xlu0 %371
      %375 = vset.pattern.permute.xlu0 0
      %376 = vperm.xlu0 %375, %v318
      %v377 = vpop.permute.xlu0 %376
      %380 = vset.pattern.permute.xlu0 0
      %381 = vperm.xlu0 %380, %v319
      %v382 = vpop.permute.xlu0 %381
      %385 = vset.pattern.permute.xlu0 0
      %386 = vperm.xlu0 %385, %v320
      %v387 = vpop.permute.xlu0 %386
      %390 = vset.pattern.permute.xlu0 0
      %391 = vperm.xlu0 %390, %v321
      %v392 = vpop.permute.xlu0 %391
      %395 = vset.pattern.permute.xlu0 0
      %396 = vperm.xlu0 %395, %v322
      %v397 = vpop.permute.xlu0 %396
      %400 = vset.pattern.permute.xlu0 0
      %401 = vperm.xlu0 %400, %v323
      %v402 = vpop.permute.xlu0 %401
      %v405 = vlaneseq
      %v406 = vshrl.u32 %v405, 7
      %v407 = vsub.s32 0, %v406
      %v408 = vrot.slane %v307, %v407
      %v409 = vlaneseq
      %v410 = vshrl.u32 %v409, 7
      %v411 = vsub.s32 1, %v410
      %v412 = vrot.slane %v307, %v411
      %v415 = vadd.f32 %v327, %v408
      %v416 = vadd.f32 %v327, %v412
      %v417 = vadd.f32 %v332, %v408
      %v418 = vadd.f32 %v332, %v412
      %v419 = vadd.f32 %v337, %v408
      %v420 = vadd.f32 %v337, %v412
      %v421 = vadd.f32 %v342, %v408
      %v422 = vadd.f32 %v342, %v412
      %v423 = vadd.f32 %v347, %v408
      %v424 = vadd.f32 %v347, %v412
      %v425 = vadd.f32 %v352, %v408
      %v426 = vadd.f32 %v352, %v412
      %v427 = vadd.f32 %v357, %v408
      %v428 = vadd.f32 %v357, %v412
      %v429 = vadd.f32 %v362, %v408
      %v430 = vadd.f32 %v362, %v412
      %v431 = vadd.f32 %v367, %v408
      %v432 = vadd.f32 %v367, %v412
      %v433 = vadd.f32 %v372, %v408
      %v434 = vadd.f32 %v372, %v412
      %v435 = vadd.f32 %v377, %v408
      %v436 = vadd.f32 %v377, %v412
      %v437 = vadd.f32 %v382, %v408
      %v438 = vadd.f32 %v382, %v412
      %v439 = vadd.f32 %v387, %v408
      %v440 = vadd.f32 %v387, %v412
      %v441 = vadd.f32 %v392, %v408
      %v442 = vadd.f32 %v392, %v412
      %v443 = vadd.f32 %v397, %v408
      %v444 = vadd.f32 %v397, %v412
      %v445 = vadd.f32 %v402, %v408
      %v446 = vadd.f32 %v402, %v412
      %v447 = vmul.f32 %v415, 0.01
      %v448 = vmul.f32 %v416, 0.01
      %v449 = vmul.f32 %v417, 0.01
      %v450 = vmul.f32 %v418, 0.01
      %v451 = vmul.f32 %v419, 0.01
      %v452 = vmul.f32 %v420, 0.01
      %v453 = vmul.f32 %v421, 0.01
      %v454 = vmul.f32 %v422, 0.01
      %v455 = vmul.f32 %v423, 0.01
      %v456 = vmul.f32 %v424, 0.01
      %v457 = vmul.f32 %v425, 0.01
      %v458 = vmul.f32 %v426, 0.01
      %v459 = vmul.f32 %v427, 0.01
      %v460 = vmul.f32 %v428, 0.01
      %v461 = vmul.f32 %v429, 0.01
      %v462 = vmul.f32 %v430, 0.01
      %v463 = vmul.f32 %v431, 0.01
      %v464 = vmul.f32 %v432, 0.01
      %v465 = vmul.f32 %v433, 0.01
      %v466 = vmul.f32 %v434, 0.01
      %v467 = vmul.f32 %v435, 0.01
      %v468 = vmul.f32 %v436, 0.01
      %v469 = vmul.f32 %v437, 0.01
      %v470 = vmul.f32 %v438, 0.01
      %v471 = vmul.f32 %v439, 0.01
      %v472 = vmul.f32 %v440, 0.01
      %v473 = vmul.f32 %v441, 0.01
      %v474 = vmul.f32 %v442, 0.01
      %v475 = vmul.f32 %v443, 0.01
      %v476 = vmul.f32 %v444, 0.01
      %v477 = vmul.f32 %v445, 0.01
      %v478 = vmul.f32 %v446, 0.01
      %v479 = vmax.f32 %v415, %v447
      %v480 = vmax.f32 %v416, %v448
      %v481 = vmax.f32 %v417, %v449
      %v482 = vmax.f32 %v418, %v450
      %v483 = vmax.f32 %v419, %v451
      %v484 = vmax.f32 %v420, %v452
      %v485 = vmax.f32 %v421, %v453
      %v486 = vmax.f32 %v422, %v454
      %v487 = vmax.f32 %v423, %v455
      %v488 = vmax.f32 %v424, %v456
      %v489 = vmax.f32 %v425, %v457
      %v490 = vmax.f32 %v426, %v458
      %v491 = vmax.f32 %v427, %v459
      %v492 = vmax.f32 %v428, %v460
      %v493 = vmax.f32 %v429, %v461
      %v494 = vmax.f32 %v430, %v462
      %v495 = vmax.f32 %v431, %v463
      %v496 = vmax.f32 %v432, %v464
      %v497 = vmax.f32 %v433, %v465
      %v498 = vmax.f32 %v434, %v466
      %v499 = vmax.f32 %v435, %v467
      %v500 = vmax.f32 %v436, %v468
      %v501 = vmax.f32 %v437, %v469
      %v502 = vmax.f32 %v438, %v470
      %v503 = vmax.f32 %v439, %v471
      %v504 = vmax.f32 %v440, %v472
      %v505 = vmax.f32 %v441, %v473
      %v506 = vmax.f32 %v442, %v474
      %v507 = vmax.f32 %v443, %v475
      %v508 = vmax.f32 %v444, %v476
      %v509 = vmax.f32 %v445, %v477
      %v510 = vmax.f32 %v446, %v478
      %v511 = vadd.f32 %v479, %v243
      %v512 = vadd.f32 %v480, %v244
      %v513 = vadd.f32 %v481, %v245
      %v514 = vadd.f32 %v482, %v246
      %v515 = vadd.f32 %v483, %v247
      %v516 = vadd.f32 %v484, %v248
      %v517 = vadd.f32 %v485, %v249
      %v518 = vadd.f32 %v486, %v250
      %v519 = vadd.f32 %v487, %v251
      %v520 = vadd.f32 %v488, %v252
      %v521 = vadd.f32 %v489, %v253
      %v522 = vadd.f32 %v490, %v254
      %v523 = vadd.f32 %v491, %v255
      %v524 = vadd.f32 %v492, %v256
      %v525 = vadd.f32 %v493, %v257
      %v526 = vadd.f32 %v494, %v258
      %v527 = vadd.f32 %v495, %v259
      %v528 = vadd.f32 %v496, %v260
      %v529 = vadd.f32 %v497, %v261
      %v530 = vadd.f32 %v498, %v262
      %v531 = vadd.f32 %v499, %v263
      %v532 = vadd.f32 %v500, %v264
      %v533 = vadd.f32 %v501, %v265
      %v534 = vadd.f32 %v502, %v266
      %v535 = vadd.f32 %v503, %v267
      %v536 = vadd.f32 %v504, %v268
      %v537 = vadd.f32 %v505, %v269
      %v538 = vadd.f32 %v506, %v270
      %v539 = vadd.f32 %v507, %v271
      %v540 = vadd.f32 %v508, %v272
      %v541 = vadd.f32 %v509, %v273
      %v542 = vadd.f32 %v510, %v274
      %v543 = vmax.f32 %v511, %v512
      %544 = vmax.xlane.f32.xlu0 %v543
      %v545 = vpop.xlane.xlu0 %544
      %v546 = vmax.f32 %v513, %v514
      %547 = vmax.xlane.f32.xlu0 %v546
      %v548 = vpop.xlane.xlu0 %547
      %v549 = vmax.f32 %v515, %v516
      %550 = vmax.xlane.f32.xlu0 %v549
      %v551 = vpop.xlane.xlu0 %550
      %v552 = vmax.f32 %v517, %v518
      %553 = vmax.xlane.f32.xlu0 %v552
      %v554 = vpop.xlane.xlu0 %553
      %v555 = vmax.f32 %v519, %v520
      %556 = vmax.xlane.f32.xlu0 %v555
      %v557 = vpop.xlane.xlu0 %556
      %v558 = vmax.f32 %v521, %v522
      %559 = vmax.xlane.f32.xlu0 %v558
      %v560 = vpop.xlane.xlu0 %559
      %v561 = vmax.f32 %v523, %v524
      %562 = vmax.xlane.f32.xlu0 %v561
      %v563 = vpop.xlane.xlu0 %562
      %v564 = vmax.f32 %v525, %v526
      %565 = vmax.xlane.f32.xlu0 %v564
      %v566 = vpop.xlane.xlu0 %565
      %v567 = vmax.f32 %v527, %v528
      %568 = vmax.xlane.f32.xlu0 %v567
      %v569 = vpop.xlane.xlu0 %568
      %v570 = vmax.f32 %v529, %v530
      %571 = vmax.xlane.f32.xlu0 %v570
      %v572 = vpop.xlane.xlu0 %571
      %v573 = vmax.f32 %v531, %v532
      %574 = vmax.xlane.f32.xlu0 %v573
      %v575 = vpop.xlane.xlu0 %574
      %v576 = vmax.f32 %v533, %v534
      %577 = vmax.xlane.f32.xlu0 %v576
      %v578 = vpop.xlane.xlu0 %577
      %v579 = vmax.f32 %v535, %v536
      %580 = vmax.xlane.f32.xlu0 %v579
      %v581 = vpop.xlane.xlu0 %580
      %v582 = vmax.f32 %v537, %v538
      %583 = vmax.xlane.f32.xlu0 %v582
      %v584 = vpop.xlane.xlu0 %583
      %v585 = vmax.f32 %v539, %v540
      %586 = vmax.xlane.f32.xlu0 %v585
      %v587 = vpop.xlane.xlu0 %586
      %v588 = vmax.f32 %v541, %v542
      %589 = vmax.xlane.f32.xlu0 %v588
      %v590 = vpop.xlane.xlu0 %589
      %v591 = vsub.f32 %v511, %v545
      %v592 = vsub.f32 %v512, %v545
      %v593 = vsub.f32 %v513, %v548
      %v594 = vsub.f32 %v514, %v548
      %v595 = vsub.f32 %v515, %v551
      %v596 = vsub.f32 %v516, %v551
      %v597 = vsub.f32 %v517, %v554
      %v598 = vsub.f32 %v518, %v554
      %v599 = vsub.f32 %v519, %v557
      %v600 = vsub.f32 %v520, %v557
      %v601 = vsub.f32 %v521, %v560
      %v602 = vsub.f32 %v522, %v560
      %v603 = vsub.f32 %v523, %v563
      %v604 = vsub.f32 %v524, %v563
      %v605 = vsub.f32 %v525, %v566
      %v606 = vsub.f32 %v526, %v566
      %v607 = vsub.f32 %v527, %v569
      %v608 = vsub.f32 %v528, %v569
      %v609 = vsub.f32 %v529, %v572
      %v610 = vsub.f32 %v530, %v572
      %v611 = vsub.f32 %v531, %v575
      %v612 = vsub.f32 %v532, %v575
      %v613 = vsub.f32 %v533, %v578
      %v614 = vsub.f32 %v534, %v578
      %v615 = vsub.f32 %v535, %v581
      %v616 = vsub.f32 %v536, %v581
      %v617 = vsub.f32 %v537, %v584
      %v618 = vsub.f32 %v538, %v584
      %v619 = vsub.f32 %v539, %v587
      %v620 = vsub.f32 %v540, %v587
      %v621 = vsub.f32 %v541, %v590
      %v622 = vsub.f32 %v542, %v590
      %v623 = vmul.f32 %v591, 1.442695
      %v624 = vpow.pop %v623
      %v625 = vmul.f32 %v592, 1.442695
      %v626 = vpow.pop %v625
      %v627 = vmul.f32 %v593, 1.442695
      %v628 = vpow.pop %v627
      %v629 = vmul.f32 %v594, 1.442695
      %v630 = vpow.pop %v629
      %v631 = vmul.f32 %v595, 1.442695
      %v632 = vpow.pop %v631
      %v633 = vmul.f32 %v596, 1.442695
      %v634 = vpow.pop %v633
      %v635 = vmul.f32 %v597, 1.442695
      %v636 = vpow.pop %v635
      %v637 = vmul.f32 %v598, 1.442695
      %v638 = vpow.pop %v637
      %v639 = vmul.f32 %v599, 1.442695
      %v640 = vpow.pop %v639
      %v641 = vmul.f32 %v600, 1.442695
      %v642 = vpow.pop %v641
      %v643 = vmul.f32 %v601, 1.442695
      %v644 = vpow.pop %v643
      %v645 = vmul.f32 %v602, 1.442695
      %v646 = vpow.pop %v645
      %v647 = vmul.f32 %v603, 1.442695
      %v648 = vpow.pop %v647
      %v649 = vmul.f32 %v604, 1.442695
      %v650 = vpow.pop %v649
      %v651 = vmul.f32 %v605, 1.442695
      %v652 = vpow.pop %v651
      %v653 = vmul.f32 %v606, 1.442695
      %v654 = vpow.pop %v653
      %v655 = vmul.f32 %v607, 1.442695
      %v656 = vpow.pop %v655
      %v657 = vmul.f32 %v608, 1.442695
      %v658 = vpow.pop %v657
      %v659 = vmul.f32 %v609, 1.442695
      %v660 = vpow.pop %v659
      %v661 = vmul.f32 %v610, 1.442695
      %v662 = vpow.pop %v661
      %v663 = vmul.f32 %v611, 1.442695
      %v664 = vpow.pop %v663
      %v665 = vmul.f32 %v612, 1.442695
      %v666 = vpow.pop %v665
      %v667 = vmul.f32 %v613, 1.442695
      %v668 = vpow.pop %v667
      %v669 = vmul.f32 %v614, 1.442695
      %v670 = vpow.pop %v669
      %v671 = vmul.f32 %v615, 1.442695
      %v672 = vpow.pop %v671
      %v673 = vmul.f32 %v616, 1.442695
      %v674 = vpow.pop %v673
      %v675 = vmul.f32 %v617, 1.442695
      %v676 = vpow.pop %v675
      %v677 = vmul.f32 %v618, 1.442695
      %v678 = vpow.pop %v677
      %v679 = vmul.f32 %v619, 1.442695
      %v680 = vpow.pop %v679
      %v681 = vmul.f32 %v620, 1.442695
      %v682 = vpow.pop %v681
      %v683 = vmul.f32 %v621, 1.442695
      %v684 = vpow.pop %v683
      %v685 = vmul.f32 %v622, 1.442695
      %v686 = vpow.pop %v685
      %v687 = vadd.f32 %v624, %v626
      %688 = vadd.xlane.f32.xlu0 %v687
      %v689 = vpop.xlane.xlu0 %688
      %v690 = vadd.f32 %v628, %v630
      %691 = vadd.xlane.f32.xlu0 %v690
      %v692 = vpop.xlane.xlu0 %691
      %v693 = vadd.f32 %v632, %v634
      %694 = vadd.xlane.f32.xlu0 %v693
      %v695 = vpop.xlane.xlu0 %694
      %v696 = vadd.f32 %v636, %v638
      %697 = vadd.xlane.f32.xlu0 %v696
      %v698 = vpop.xlane.xlu0 %697
      %v699 = vadd.f32 %v640, %v642
      %700 = vadd.xlane.f32.xlu0 %v699
      %v701 = vpop.xlane.xlu0 %700
      %v702 = vadd.f32 %v644, %v646
      %703 = vadd.xlane.f32.xlu0 %v702
      %v704 = vpop.xlane.xlu0 %703
      %v705 = vadd.f32 %v648, %v650
      %706 = vadd.xlane.f32.xlu0 %v705
      %v707 = vpop.xlane.xlu0 %706
      %v708 = vadd.f32 %v652, %v654
      %709 = vadd.xlane.f32.xlu0 %v708
      %v710 = vpop.xlane.xlu0 %709
      %v711 = vadd.f32 %v656, %v658
      %712 = vadd.xlane.f32.xlu0 %v711
      %v713 = vpop.xlane.xlu0 %712
      %v714 = vadd.f32 %v660, %v662
      %715 = vadd.xlane.f32.xlu0 %v714
      %v716 = vpop.xlane.xlu0 %715
      %v717 = vadd.f32 %v664, %v666
      %718 = vadd.xlane.f32.xlu0 %v717
      %v719 = vpop.xlane.xlu0 %718
      %v720 = vadd.f32 %v668, %v670
      %721 = vadd.xlane.f32.xlu0 %v720
      %v722 = vpop.xlane.xlu0 %721
      %v723 = vadd.f32 %v672, %v674
      %724 = vadd.xlane.f32.xlu0 %v723
      %v725 = vpop.xlane.xlu0 %724
      %v726 = vadd.f32 %v676, %v678
      %727 = vadd.xlane.f32.xlu0 %v726
      %v728 = vpop.xlane.xlu0 %727
      %v729 = vadd.f32 %v680, %v682
      %730 = vadd.xlane.f32.xlu0 %v729
      %v731 = vpop.xlane.xlu0 %730
      %v732 = vadd.f32 %v684, %v686
      %733 = vadd.xlane.f32.xlu0 %v732
      %v734 = vpop.xlane.xlu0 %733
      %v735 = vmax.f32 %v689, 1e-20
      %v736 = vmax.f32 %v692, 1e-20
      %v737 = vmax.f32 %v695, 1e-20
      %v738 = vmax.f32 %v698, 1e-20
      %v739 = vmax.f32 %v701, 1e-20
      %v740 = vmax.f32 %v704, 1e-20
      %v741 = vmax.f32 %v707, 1e-20
      %v742 = vmax.f32 %v710, 1e-20
      %v743 = vmax.f32 %v713, 1e-20
      %v744 = vmax.f32 %v716, 1e-20
      %v745 = vmax.f32 %v719, 1e-20
      %v746 = vmax.f32 %v722, 1e-20
      %v747 = vmax.f32 %v725, 1e-20
      %v748 = vmax.f32 %v728, 1e-20
      %v749 = vmax.f32 %v731, 1e-20
      %v750 = vmax.f32 %v734, 1e-20
      %v751 = vpack.c.bf16 %v628, %v624
      %v752 = vpack.c.bf16 %v630, %v626
      %v753 = vpack.c.bf16 %v636, %v632
      %v754 = vpack.c.bf16 %v638, %v634
      %v755 = vpack.c.bf16 %v644, %v640
      %v756 = vpack.c.bf16 %v646, %v642
      %v757 = vpack.c.bf16 %v652, %v648
      %v758 = vpack.c.bf16 %v654, %v650
      %v759 = vpack.c.bf16 %v660, %v656
      %v760 = vpack.c.bf16 %v662, %v658
      %v761 = vpack.c.bf16 %v668, %v664
      %v762 = vpack.c.bf16 %v670, %v666
      %v763 = vpack.c.bf16 %v676, %v672
      %v764 = vpack.c.bf16 %v678, %v674
      %v765 = vpack.c.bf16 %v684, %v680
      %v766 = vpack.c.bf16 %v686, %v682
      %v799 = vunpack.c.l.b16 %v275
      %v800 = vunpack.c.l.b16 %v276
      %v801 = vunpack.c.l.b16 %v277
      %v802 = vunpack.c.l.b16 %v278
      %v803 = vunpack.c.l.b16 %v279
      %v804 = vunpack.c.l.b16 %v280
      %v805 = vunpack.c.l.b16 %v281
      %v806 = vunpack.c.l.b16 %v282
      %v807 = vunpack.c.l.b16 %v283
      %v808 = vunpack.c.l.b16 %v284
      %v809 = vunpack.c.l.b16 %v285
      %v810 = vunpack.c.l.b16 %v286
      %v811 = vunpack.c.l.b16 %v287
      %v812 = vunpack.c.l.b16 %v288
      %v813 = vunpack.c.l.b16 %v289
      %v814 = vunpack.c.l.b16 %v290
      %v815 = vunpack.c.l.b16 %v291
      %v816 = vunpack.c.l.b16 %v292
      %v817 = vunpack.c.l.b16 %v293
      %v818 = vunpack.c.l.b16 %v294
      %v819 = vunpack.c.l.b16 %v295
      %v820 = vunpack.c.l.b16 %v296
      %v821 = vunpack.c.l.b16 %v297
      %v822 = vunpack.c.l.b16 %v298
      %v823 = vunpack.c.l.b16 %v299
      %v824 = vunpack.c.l.b16 %v300
      %v825 = vunpack.c.l.b16 %v301
      %v826 = vunpack.c.l.b16 %v302
      %v827 = vunpack.c.l.b16 %v303
      %v828 = vunpack.c.l.b16 %v304
      %v829 = vunpack.c.l.b16 %v305
      %v830 = vunpack.c.l.b16 %v306
      %v831 = vpack.c.b16 %v800, %v799
      %v832 = vpack.c.b16 %v802, %v801
      %v833 = vpack.c.b16 %v804, %v803
      %v834 = vpack.c.b16 %v806, %v805
      %v835 = vpack.c.b16 %v808, %v807
      %v836 = vpack.c.b16 %v810, %v809
      %v837 = vpack.c.b16 %v812, %v811
      %v838 = vpack.c.b16 %v814, %v813
      %v839 = vpack.c.b16 %v816, %v815
      %v840 = vpack.c.b16 %v818, %v817
      %v841 = vpack.c.b16 %v820, %v819
      %v842 = vpack.c.b16 %v822, %v821
      %v843 = vpack.c.b16 %v824, %v823
      %v844 = vpack.c.b16 %v826, %v825
      %v845 = vpack.c.b16 %v828, %v827
      %v846 = vpack.c.b16 %v830, %v829
      %863 = vmatprep.subr.bf16.mxu0 0
      %864 = vmatpush1.bf16.msra.mxu0 %v831
      %865 = vmatprep.subr.bf16.mxu0 0
      %866 = vmatpush1.bf16.msra.mxu0 %v832
      %867 = vmatprep.subr.bf16.mxu0 0
      %868 = vmatpush1.bf16.msra.mxu0 %v833
      %869 = vmatprep.subr.bf16.mxu0 0
      %870 = vmatpush1.bf16.msra.mxu0 %v834
      %871 = vmatprep.subr.bf16.mxu0 0
      %872 = vmatpush1.bf16.msra.mxu0 %v835
      %873 = vmatprep.subr.bf16.mxu0 0
      %874 = vmatpush1.bf16.msra.mxu0 %v836
      %875 = vmatprep.subr.bf16.mxu0 0
      %876 = vmatpush1.bf16.msra.mxu0 %v837
      %877 = vmatprep.subr.bf16.mxu0 0
      %878 = vmatpush1.bf16.msra.mxu0 %v838
      %879 = vmatprep.subr.bf16.mxu0 0
      %880 = vmatpush1.bf16.msra.mxu0 %v839
      %881 = vmatprep.subr.bf16.mxu0 0
      %882 = vmatpush1.bf16.msra.mxu0 %v840
      %883 = vmatprep.subr.bf16.mxu0 0
      %884 = vmatpush1.bf16.msra.mxu0 %v841
      %885 = vmatprep.subr.bf16.mxu0 0
      %886 = vmatpush1.bf16.msra.mxu0 %v842
      %887 = vmatprep.subr.bf16.mxu0 0
      %888 = vmatpush1.bf16.msra.mxu0 %v843
      %889 = vmatprep.subr.bf16.mxu0 0
      %890 = vmatpush1.bf16.msra.mxu0 %v844
      %891 = vmatprep.subr.bf16.mxu0 0
      %892 = vmatpush1.bf16.msra.mxu0 %v845
      %893 = vmatprep.subr.bf16.mxu0 0
      %894 = vmatpush1.bf16.msra.mxu0 %v846
      %895 = vmatprep.mubr.bf16.mxu0 %v752
      %896 = vmatmul.mubr.bf16.gmra.mrb[0].mxu0 %v751
      %v897 = vpop.f32.mrb[0].mxu0
      %v898 = vadd.f32 0.0, %v897
      %v899 = vpop.f32.mrb[0].mxu0
      %v900 = vpop.f32.mrb[0].mxu0
      %v901 = vadd.f32 0.0, %v900
      %v902 = vpop.f32.mrb[0].mxu0
      %903 = vmatprep.mubr.bf16.mxu0 %v754
      %904 = vmatmul.mubr.bf16.gmra.mrb[0].mxu0 %v753
      %v905 = vpop.f32.mrb[0].mxu0
      %v906 = vadd.f32 0.0, %v905
      %v907 = vpop.f32.mrb[0].mxu0
      %v908 = vpop.f32.mrb[0].mxu0
      %v909 = vadd.f32 0.0, %v908
      %v910 = vpop.f32.mrb[0].mxu0
      %911 = vmatprep.mubr.bf16.mxu0 %v756
      %912 = vmatmul.mubr.bf16.gmra.mrb[0].mxu0 %v755
      %v913 = vpop.f32.mrb[0].mxu0
      %v914 = vadd.f32 0.0, %v913
      %v915 = vpop.f32.mrb[0].mxu0
      %v916 = vpop.f32.mrb[0].mxu0
      %v917 = vadd.f32 0.0, %v916
      %v918 = vpop.f32.mrb[0].mxu0
      %919 = vmatprep.mubr.bf16.mxu0 %v758
      %920 = vmatmul.mubr.bf16.gmra.mrb[0].mxu0 %v757
      %v921 = vpop.f32.mrb[0].mxu0
      %v922 = vadd.f32 0.0, %v921
      %v923 = vpop.f32.mrb[0].mxu0
      %v924 = vpop.f32.mrb[0].mxu0
      %v925 = vadd.f32 0.0, %v924
      %v926 = vpop.f32.mrb[0].mxu0
      %927 = vmatprep.mubr.bf16.mxu0 %v760
      %928 = vmatmul.mubr.bf16.gmra.mrb[0].mxu0 %v759
      %v929 = vpop.f32.mrb[0].mxu0
      %v930 = vadd.f32 0.0, %v929
      %v931 = vpop.f32.mrb[0].mxu0
      %v932 = vpop.f32.mrb[0].mxu0
      %v933 = vadd.f32 0.0, %v932
      %v934 = vpop.f32.mrb[0].mxu0
      %935 = vmatprep.mubr.bf16.mxu0 %v762
      %936 = vmatmul.mubr.bf16.gmra.mrb[0].mxu0 %v761
      %v937 = vpop.f32.mrb[0].mxu0
      %v938 = vadd.f32 0.0, %v937
      %v939 = vpop.f32.mrb[0].mxu0
      %v940 = vpop.f32.mrb[0].mxu0
      %v941 = vadd.f32 0.0, %v940
      %v942 = vpop.f32.mrb[0].mxu0
      %943 = vmatprep.mubr.bf16.mxu0 %v764
      %944 = vmatmul.mubr.bf16.gmra.mrb[0].mxu0 %v763
      %v945 = vpop.f32.mrb[0].mxu0
      %v946 = vadd.f32 0.0, %v945
      %v947 = vpop.f32.mrb[0].mxu0
      %v948 = vpop.f32.mrb[0].mxu0
      %v949 = vadd.f32 0.0, %v948
      %v950 = vpop.f32.mrb[0].mxu0
      %951 = vmatprep.mubr.bf16.mxu0 %v766
      %952 = vmatmul.mubr.bf16.gmra.mrb[0].mxu0 %v765
      %v953 = vpop.f32.mrb[0].mxu0
      %v954 = vadd.f32 0.0, %v953
      %v955 = vpop.f32.mrb[0].mxu0
      %v956 = vpop.f32.mrb[0].mxu0
      %v957 = vadd.f32 0.0, %v956
      %v958 = vpop.f32.mrb[0].mxu0
      %959 = vdwg.mxu0
      %v960 = vrcp.pop %v735
      %v961 = vrcp.pop %v736
      %v962 = vrcp.pop %v737
      %v963 = vrcp.pop %v738
      %v964 = vrcp.pop %v739
      %v965 = vrcp.pop %v740
      %v966 = vrcp.pop %v741
      %v967 = vrcp.pop %v742
      %v968 = vrcp.pop %v743
      %v969 = vrcp.pop %v744
      %v970 = vrcp.pop %v745
      %v971 = vrcp.pop %v746
      %v972 = vrcp.pop %v747
      %v973 = vrcp.pop %v748
      %v974 = vrcp.pop %v749
      %v975 = vrcp.pop %v750
      %v976 = vmul.f32 %v898, %v960
      %v977 = vmul.f32 %v901, %v961
      %v978 = vmul.f32 %v906, %v962
      %v979 = vmul.f32 %v909, %v963
      %v980 = vmul.f32 %v914, %v964
      %v981 = vmul.f32 %v917, %v965
      %v982 = vmul.f32 %v922, %v966
      %v983 = vmul.f32 %v925, %v967
      %v984 = vmul.f32 %v930, %v968
      %v985 = vmul.f32 %v933, %v969
      %v986 = vmul.f32 %v938, %v970
      %v987 = vmul.f32 %v941, %v971
      %v988 = vmul.f32 %v946, %v972
      %v989 = vmul.f32 %v949, %v973
      %v990 = vmul.f32 %v954, %v974
      %v991 = vmul.f32 %v957, %v975
      %992 = vst [vmem:[%s224] sm:$0xff] %v976
      %993 = vst [vmem:[%s224 + $0x8] sm:$0xff] %v977
      %994 = vst [vmem:[%s224 + $0x10] sm:$0xff] %v978
      %995 = vst [vmem:[%s224 + $0x18] sm:$0xff] %v979
      %996 = vst [vmem:[%s224 + $0x20] sm:$0xff] %v980
      %997 = vst [vmem:[%s224 + $0x28] sm:$0xff] %v981
      %998 = vst [vmem:[%s224 + $0x30] sm:$0xff] %v982
      %999 = vst [vmem:[%s224 + $0x38] sm:$0xff] %v983
      %1000 = vst [vmem:[%s224 + $0x40] sm:$0xff] %v984
      %1001 = vst [vmem:[%s224 + $0x48] sm:$0xff] %v985
      %1002 = vst [vmem:[%s224 + $0x50] sm:$0xff] %v986
      %1003 = vst [vmem:[%s224 + $0x58] sm:$0xff] %v987
      %1004 = vst [vmem:[%s224 + $0x60] sm:$0xff] %v988
      %1005 = vst [vmem:[%s224 + $0x68] sm:$0xff] %v989
      %1006 = vst [vmem:[%s224 + $0x70] sm:$0xff] %v990
      %1007 = vst [vmem:[%s224 + $0x78] sm:$0xff] %v991
      %s1008 = smul.u32 16, %s15
      %p1009 = scmp.lt.s32.totalorder %s1008, 31
      %s1010 = scalar_select %p1009, %s1008, 31
      %s1011 = smul.addr %s1010, 8
      %s1012 = scalar_lea.vmem %s4, %s1011
      // Predicated region
      $region37: #{gat_forward.3} parent=35 // pred_check
        %p1013 = pneg %p127
      $region38: #{gat_forward.3} parent=35 // pred_check_branch
        %1015 = sbr.rel (%p1013) target = $region40
      $region39: #{gat_forward.3} parent=35 // pred_region
        %s1016 = smul.u32 16, %s15
      $region40: #{gat_forward.3} parent=35 // pred_fallthru
        _
    $region36: #{gat_forward.3} parent=5 // pred_fallthru
      _
    %p1017 = scmp.le.s32.totalorder 2, %s10
    // Predicated region
    $region41: #{gat_forward.3} parent=5 // pred_check
      %p1018 = pneg %p1017
    $region42: #{gat_forward.3} parent=5 // pred_check_branch
      %1020 = sbr.rel (%p1018) target = $region44
    $region43: #{gat_forward.3} parent=5 // pred_region
      %s1021 = ssub.s32 %s10, 2
      // Predicated region
      $region45: #{gat_forward.3} parent=43 // pred_check
        %p1022 = pneg %p133
      $region46: #{gat_forward.3} parent=43 // pred_check_branch
        %1024 = sbr.rel (%p1022) target = $region48
      $region47: #{gat_forward.3} parent=43 // pred_region
        %s1025 = smul.u32 16, %s16
        %p1026 = scmp.lt.s32.totalorder %s1025, 31
        %s1027 = scalar_select %p1026, %s1025, 31
        %s1028 = smul.addr %s1027, 8
        %s1029 = scalar_lea.vmem %s4, %s1028
      $region48: #{gat_forward.3} parent=43 // pred_fallthru
        _
    $region44: #{gat_forward.3} parent=5 // pred_fallthru
      _
  $region6: #{gat_forward.3} parent=0 // loop_footer
    %s14 = sadd.s32 1, %s10
  $region7: #{gat_forward.3} parent=0 // loop_footer_branch
    %9 = sbr.rel target = $region3
  $region8: #{gat_forward.3} parent=0 // loop_exit
    _

// kernel: gat_forward.2
$region0: #{gat_forward.2}
  #allocation0 [shape = 'u32[]', space=smem, size = 0x4, offset = 0x4, fixed_abs, tag = 'smem constant byte address 0x4 - core index']
  #allocation1 [shape = 'u32[144,128]{1,0:T(1,128)}', space=vmem, size = 0x12000, scoped, tag = 'internal scratch']
  %s0 = inlined_call_operand.vmem [shape: bf16[256,256], index: 0, kind: input, shape index: {}]
  %s1 = inlined_call_operand.vmem [shape: f32[2,256], index: 1, kind: input, shape index: {}]
  %s2 = inlined_call_operand.vmem [shape: f32[256,2], index: 2, kind: input, shape index: {}]
  %s3 = inlined_call_operand.vmem [shape: bf16[256,256], index: 3, kind: input, shape index: {}]
  %s4 = inlined_call_operand.vmem [shape: bf16[256,256], index: 4, kind: output, shape index: {}]
  %s5 = sld [smem:[#allocation0]]
  $region49: #{gat_forward.2} parent=0
    _
  %s7 = ssub.s32 1, %s5
  %s8 = scalar_select 0, %s7, %s5
  loop: start=0, step=1, limit=4
  $region2: #{gat_forward.2} parent=0 // loop_pre_header
    _
  $region3: #{gat_forward.2} parent=0 // loop_header
    %s10 = sphi 0, %s14
    %p11 = scmp.ge.s32.totalorder %s10, 4
    %s18 = sphi 0, %s18
    %s20 = sphi 0, %s18
    %s21 = sphi 0, %s20
    %s35 = sphi 0, %s21
    %s39 = sphi 0, %s39
    %s41 = sphi 0, %s39
    %s42 = sphi 0, %s41
    %s56 = sphi 0, %s42
    %s62 = sphi 0, %s64
    %s65 = sphi 0, %s62
    %s66 = sphi 0, %s65
    %s82 = sphi 0, %s66
    %s88 = sphi 0, %s90
    %s91 = sphi 0, %s88
    %s92 = sphi 0, %s91
    %s108 = sphi 0, %s92
    %s114 = sphi 0, %s116
    %s117 = sphi 0, %s114
    %s118 = sphi 0, %s117
    %s134 = sphi 0, %s118
  $region4: #{gat_forward.2} parent=0 // loop_header_branch
    %13 = sbr.rel (%p11) target = $region8
  $region5: #{gat_forward.2} parent=0 // loop_body
    %s15 = ssub.s32 %s10, 1
    %s16 = ssub.s32 %s10, 2
    %s17 = sadd.s32 %s10, 1
    %s19 = sadd.s32 %s18, 1
    %p22 = scmp.eq.s32.totalorder %s10, 1
    %p23 = scmp.ne.s32.totalorder %s18, %s20
    %p24 = scmp.eq.s32.totalorder %s10, 0
    %p25 = por %p23, %p24
    %p26 = scmp.ne.s32.totalorder %s18, %s20
    %p27 = scmp.eq.s32.totalorder %s15, 1
    %p28 = por %p26, %p27
    %p29 = scmp.ne.s32.totalorder %s20, %s21
    %p30 = scmp.eq.s32.totalorder %s15, 0
    %p31 = por %p29, %p30
    %p32 = scmp.ne.s32.totalorder %s20, %s21
    %p33 = scmp.eq.s32.totalorder %s16, 1
    %p34 = por %p32, %p33
    %p36 = scmp.ne.s32.totalorder %s21, %s35
    %p37 = scmp.eq.s32.totalorder %s16, 0
    %p38 = por %p36, %p37
    %s40 = sadd.s32 %s39, 1
    %p43 = scmp.eq.s32.totalorder %s10, 1
    %p44 = scmp.ne.s32.totalorder %s39, %s41
    %p45 = scmp.eq.s32.totalorder %s10, 0
    %p46 = por %p44, %p45
    %p47 = scmp.ne.s32.totalorder %s39, %s41
    %p48 = scmp.eq.s32.totalorder %s15, 1
    %p49 = por %p47, %p48
    %p50 = scmp.ne.s32.totalorder %s41, %s42
    %p51 = scmp.eq.s32.totalorder %s15, 0
    %p52 = por %p50, %p51
    %p53 = scmp.ne.s32.totalorder %s41, %s42
    %p54 = scmp.eq.s32.totalorder %s16, 1
    %p55 = por %p53, %p54
    %p57 = scmp.ne.s32.totalorder %s42, %s56
    %p58 = scmp.eq.s32.totalorder %s16, 0
    %p59 = por %p57, %p58
    %s60 = ssub.s32 %s10, %s17
    %p61 = scmp.eq.s32.totalorder %s60, 0
    %s63 = sadd.s32 %s62, 1
    %s64 = scalar_select %p61, %s62, %s63
    %p67 = pneg %p61
    %p68 = scmp.eq.s32.totalorder %s10, 1
    %p69 = por %p67, %p68
    %p70 = scmp.ne.s32.totalorder %s62, %s65
    %p71 = scmp.eq.s32.totalorder %s10, 0
    %p72 = por %p70, %p71
    %p73 = scmp.ne.s32.totalorder %s62, %s65
    %p74 = scmp.eq.s32.totalorder %s15, 1
    %p75 = por %p73, %p74
    %p76 = scmp.ne.s32.totalorder %s65, %s66
    %p77 = scmp.eq.s32.totalorder %s15, 0
    %p78 = por %p76, %p77
    %p79 = scmp.ne.s32.totalorder %s65, %s66
    %p80 = scmp.eq.s32.totalorder %s16, 1
    %p81 = por %p79, %p80
    %p83 = scmp.ne.s32.totalorder %s66, %s82
    %p84 = scmp.eq.s32.totalorder %s16, 0
    %p85 = por %p83, %p84
    %s86 = ssub.s32 %s10, %s17
    %p87 = scmp.eq.s32.totalorder %s86, 0
    %s89 = sadd.s32 %s88, 1
    %s90 = scalar_select %p87, %s88, %s89
    %p93 = pneg %p87
    %p94 = scmp.eq.s32.totalorder %s10, 1
    %p95 = por %p93, %p94
    %p96 = scmp.ne.s32.totalorder %s88, %s91
    %p97 = scmp.eq.s32.totalorder %s10, 0
    %p98 = por %p96, %p97
    %p99 = scmp.ne.s32.totalorder %s88, %s91
    %p100 = scmp.eq.s32.totalorder %s15, 1
    %p101 = por %p99, %p100
    %p102 = scmp.ne.s32.totalorder %s91, %s92
    %p103 = scmp.eq.s32.totalorder %s15, 0
    %p104 = por %p102, %p103
    %p105 = scmp.ne.s32.totalorder %s91, %s92
    %p106 = scmp.eq.s32.totalorder %s16, 1
    %p107 = por %p105, %p106
    %p109 = scmp.ne.s32.totalorder %s92, %s108
    %p110 = scmp.eq.s32.totalorder %s16, 0
    %p111 = por %p109, %p110
    %s112 = ssub.s32 %s10, %s17
    %p113 = scmp.eq.s32.totalorder %s112, 0
    %s115 = sadd.s32 %s114, 1
    %s116 = scalar_select %p113, %s114, %s115
    %p119 = pneg %p113
    %p120 = scmp.eq.s32.totalorder %s10, 1
    %p121 = por %p119, %p120
    %p122 = scmp.ne.s32.totalorder %s114, %s117
    %p123 = scmp.eq.s32.totalorder %s10, 0
    %p124 = por %p122, %p123
    %p125 = scmp.ne.s32.totalorder %s114, %s117
    %p126 = scmp.eq.s32.totalorder %s15, 1
    %p127 = por %p125, %p126
    %p128 = scmp.ne.s32.totalorder %s117, %s118
    %p129 = scmp.eq.s32.totalorder %s15, 0
    %p130 = por %p128, %p129
    %p131 = scmp.ne.s32.totalorder %s117, %s118
    %p132 = scmp.eq.s32.totalorder %s16, 1
    %p133 = por %p131, %p132
    %p135 = scmp.ne.s32.totalorder %s118, %s134
    %p136 = scmp.eq.s32.totalorder %s16, 0
    %p137 = por %p135, %p136
    %p138 = scmp.le.s32.totalorder 1, %s10
    %p139 = scmp.lt.s32.totalorder %s10, 3
    %p140 = pnand %p138, %p139
    %p141 = pneg %p140
    // Predicated region
    $region9: #{gat_forward.2} parent=5 // pred_check
      _
    $region10: #{gat_forward.2} parent=5 // pred_check_branch
      %143 = sbr.rel (%p140) target = $region12
    $region11: #{gat_forward.2} parent=5 // pred_region
      %s144 = ssub.s32 %s10, 1
      // Predicated region
      $region13: #{gat_forward.2} parent=11 // pred_check
        %p145 = pneg %p31
      $region14: #{gat_forward.2} parent=11 // pred_check_branch
        %147 = sbr.rel (%p145) target = $region16
      $region15: #{gat_forward.2} parent=11 // pred_region
        _
      $region16: #{gat_forward.2} parent=11 // pred_fallthru
        _
      // Predicated region
      $region17: #{gat_forward.2} parent=11 // pred_check
        %p148 = pneg %p52
      $region18: #{gat_forward.2} parent=11 // pred_check_branch
        %150 = sbr.rel (%p148) target = $region20
      $region19: #{gat_forward.2} parent=11 // pred_region
        _
      $region20: #{gat_forward.2} parent=11 // pred_fallthru
        _
    $region12: #{gat_forward.2} parent=5 // pred_fallthru
      _
    %p151 = scmp.lt.s32.totalorder %s10, 2
    // Predicated region
    $region21: #{gat_forward.2} parent=5 // pred_check
      %p152 = pneg %p151
    $region22: #{gat_forward.2} parent=5 // pred_check_branch
      %154 = sbr.rel (%p152) target = $region24
    $region23: #{gat_forward.2} parent=5 // pred_region
      // Predicated region
      $region25: #{gat_forward.2} parent=23 // pred_check
        %p155 = pneg %p72
      $region26: #{gat_forward.2} parent=23 // pred_check_branch
        %157 = sbr.rel (%p155) target = $region28
      $region27: #{gat_forward.2} parent=23 // pred_region
        %s158 = smul.u32 16, %s10
        %p159 = scmp.lt.s32.totalorder %s158, 31
        %s160 = scalar_select %p159, %s158, 31
        %s161 = smul.addr %s160, 8
        %s162 = scalar_lea.vmem %s2, %s161
        %s163 = smul.u32 16, %s10
      $region28: #{gat_forward.2} parent=23 // pred_fallthru
        _
      // Predicated region
      $region29: #{gat_forward.2} parent=23 // pred_check
        %p164 = pneg %p98
      $region30: #{gat_forward.2} parent=23 // pred_check_branch
        %166 = sbr.rel (%p164) target = $region32
      $region31: #{gat_forward.2} parent=23 // pred_region
        %s167 = smul.u32 16, %s10
        %p168 = scmp.lt.s32.totalorder %s167, 31
        %s169 = scalar_select %p168, %s167, 31
        %s170 = smul.addr %s169, 2
        %s171 = smul.addr %s170, 4
        %s172 = scalar_lea.vmem %s3, %s171
        %s173 = smul.u32 16, %s10
      $region32: #{gat_forward.2} parent=23 // pred_fallthru
        _
    $region24: #{gat_forward.2} parent=5 // pred_fallthru
      _
    %p174 = scmp.le.s32.totalorder 1, %s10
    %p175 = scmp.lt.s32.totalorder %s10, 3
    %p176 = pnand %p174, %p175
    %p177 = pneg %p176
    // Predicated region
    $region33: #{gat_forward.2} parent=5 // pred_check
      _
    $region34: #{gat_forward.2} parent=5 // pred_check_branch
      %179 = sbr.rel (%p176) target = $region36
    $region35: #{gat_forward.2} parent=5 // pred_region
      %s180 = ssub.s32 %s10, 1
      %p181 = pneg %p31
      %p182 = pneg %p28
      %p183 = pneg %p52
      %p184 = pneg %p49
      %s185 = smul.u32 16, %s15
      %p186 = scmp.lt.s32.totalorder %s185, 31
      %s187 = scalar_select %p186, %s185, 31
      %s188 = smul.addr %s187, 8
      %s189 = scalar_lea.vmem %s2, %s188
      %p190 = pneg %p78
      %p191 = pneg %p75
      %s192 = smul.u32 16, %s15
      %p193 = scmp.lt.s32.totalorder %s192, 31
      %s194 = scalar_select %p193, %s192, 31
      %s195 = smul.addr %s194, 2
      %s196 = smul.addr %s195, 4
      %s197 = scalar_lea.vmem %s3, %s196
      %p198 = pneg %p104
      %p199 = pneg %p101
      %p200 = pneg %p130
      %p201 = pneg %p127
      %s202 = smul.u32 8, %s15
      %p203 = scmp.lt.s32.totalorder %s202, 15
      %s204 = scalar_select %p203, %s202, 15
      %s205 = smul.addr %s204, 2
      %s206 = smul.addr %s205, 8
      %s207 = scalar_lea.vmem %s4, %s206
      %s208 = smul.u32 16, %s15
      %p209 = scmp.lt.s32.totalorder %s208, 31
      %s210 = scalar_select %p209, %s208, 31
      %s211 = smul.addr %s210, 8
      %s212 = scalar_lea.vmem %s2, %s211
      %s213 = smul.u32 16, %s15
      %s214 = smul.u32 16, %s15
      %p215 = scmp.lt.s32.totalorder %s214, 31
      %s216 = scalar_select %p215, %s214, 31
      %s217 = smul.addr %s216, 2
      %s218 = smul.addr %s217, 4
      %s219 = scalar_lea.vmem %s3, %s218
      %s220 = smul.u32 16, %s15
      %s221 = smul.u32 8, %s15
      %p222 = scmp.lt.s32.totalorder %s221, 15
      %s223 = scalar_select %p222, %s221, 15
      %s224 = smul.addr %s223, 2
      %s225 = smul.addr %s224, 8
      %s226 = scalar_lea.vmem %s4, %s225
      %s227 = smul.u32 8, %s15
      %v229 = vld [vmem:[%s219] sm:$0xff]
      %v230 = vld [vmem:[%s219 + $0x8] sm:$0xff]
      %v231 = vld [vmem:[%s219 + $0x10] sm:$0xff]
      %v232 = vld [vmem:[%s219 + $0x18] sm:$0xff]
      %v233 = vld [vmem:[%s219 + $0x20] sm:$0xff]
      %v234 = vld [vmem:[%s219 + $0x28] sm:$0xff]
      %v235 = vld [vmem:[%s219 + $0x30] sm:$0xff]
      %v236 = vld [vmem:[%s219 + $0x38] sm:$0xff]
      %v237 = vld [vmem:[%s219 + $0x40] sm:$0xff]
      %v238 = vld [vmem:[%s219 + $0x48] sm:$0xff]
      %v239 = vld [vmem:[%s219 + $0x50] sm:$0xff]
      %v240 = vld [vmem:[%s219 + $0x58] sm:$0xff]
      %v241 = vld [vmem:[%s219 + $0x60] sm:$0xff]
      %v242 = vld [vmem:[%s219 + $0x68] sm:$0xff]
      %v243 = vld [vmem:[%s219 + $0x70] sm:$0xff]
      %v244 = vld [vmem:[%s219 + $0x78] sm:$0xff]
      %v245 = vunpack.c.l.bf16 %v229
      %v246 = vunpack.c.h.bf16 %v229
      %v247 = vunpack.c.l.bf16 %v230
      %v248 = vunpack.c.h.bf16 %v230
      %v249 = vunpack.c.l.bf16 %v231
      %v250 = vunpack.c.h.bf16 %v231
      %v251 = vunpack.c.l.bf16 %v232
      %v252 = vunpack.c.h.bf16 %v232
      %v253 = vunpack.c.l.bf16 %v233
      %v254 = vunpack.c.h.bf16 %v233
      %v255 = vunpack.c.l.bf16 %v234
      %v256 = vunpack.c.h.bf16 %v234
      %v257 = vunpack.c.l.bf16 %v235
      %v258 = vunpack.c.h.bf16 %v235
      %v259 = vunpack.c.l.bf16 %v236
      %v260 = vunpack.c.h.bf16 %v236
      %v261 = vunpack.c.l.bf16 %v237
      %v262 = vunpack.c.h.bf16 %v237
      %v263 = vunpack.c.l.bf16 %v238
      %v264 = vunpack.c.h.bf16 %v238
      %v265 = vunpack.c.l.bf16 %v239
      %v266 = vunpack.c.h.bf16 %v239
      %v267 = vunpack.c.l.bf16 %v240
      %v268 = vunpack.c.h.bf16 %v240
      %v269 = vunpack.c.l.bf16 %v241
      %v270 = vunpack.c.h.bf16 %v241
      %v271 = vunpack.c.l.bf16 %v242
      %v272 = vunpack.c.h.bf16 %v242
      %v273 = vunpack.c.l.bf16 %v243
      %v274 = vunpack.c.h.bf16 %v243
      %v275 = vunpack.c.l.bf16 %v244
      %v276 = vunpack.c.h.bf16 %v244
      %v277 = vld [vmem:[%s0] sm:$0xf]
      %v278 = vld [vmem:[%s0 + $0x8] sm:$0xf]
      %v279 = vld [vmem:[%s0 + $0x10] sm:$0xf]
      %v280 = vld [vmem:[%s0 + $0x18] sm:$0xf]
      %v281 = vld [vmem:[%s0 + $0x20] sm:$0xf]
      %v282 = vld [vmem:[%s0 + $0x28] sm:$0xf]
      %v283 = vld [vmem:[%s0 + $0x30] sm:$0xf]
      %v284 = vld [vmem:[%s0 + $0x38] sm:$0xf]
      %v285 = vld [vmem:[%s0 + $0x40] sm:$0xf]
      %v286 = vld [vmem:[%s0 + $0x48] sm:$0xf]
      %v287 = vld [vmem:[%s0 + $0x50] sm:$0xf]
      %v288 = vld [vmem:[%s0 + $0x58] sm:$0xf]
      %v289 = vld [vmem:[%s0 + $0x60] sm:$0xf]
      %v290 = vld [vmem:[%s0 + $0x68] sm:$0xf]
      %v291 = vld [vmem:[%s0 + $0x70] sm:$0xf]
      %v292 = vld [vmem:[%s0 + $0x78] sm:$0xf]
      %v293 = vld [vmem:[%s0 + $0x80] sm:$0xf]
      %v294 = vld [vmem:[%s0 + $0x88] sm:$0xf]
      %v295 = vld [vmem:[%s0 + $0x90] sm:$0xf]
      %v296 = vld [vmem:[%s0 + $0x98] sm:$0xf]
      %v297 = vld [vmem:[%s0 + $0xa0] sm:$0xf]
      %v298 = vld [vmem:[%s0 + $0xa8] sm:$0xf]
      %v299 = vld [vmem:[%s0 + $0xb0] sm:$0xf]
      %v300 = vld [vmem:[%s0 + $0xb8] sm:$0xf]
      %v301 = vld [vmem:[%s0 + $0xc0] sm:$0xf]
      %v302 = vld [vmem:[%s0 + $0xc8] sm:$0xf]
      %v303 = vld [vmem:[%s0 + $0xd0] sm:$0xf]
      %v304 = vld [vmem:[%s0 + $0xd8] sm:$0xf]
      %v305 = vld [vmem:[%s0 + $0xe0] sm:$0xf]
      %v306 = vld [vmem:[%s0 + $0xe8] sm:$0xf]
      %v307 = vld [vmem:[%s0 + $0xf0] sm:$0xf]
      %v308 = vld [vmem:[%s0 + $0xf8] sm:$0xf]
      %v309 = vld [vmem:[%s1] ss:$2 sm:$0x3]
      %v310 = vld [vmem:[%s212] sm:$0xff]
      %v311 = vld [vmem:[%s212 + $0x8] sm:$0xff]
      %v312 = vld [vmem:[%s212 + $0x10] sm:$0xff]
      %v313 = vld [vmem:[%s212 + $0x18] sm:$0xff]
      %v314 = vld [vmem:[%s212 + $0x20] sm:$0xff]
      %v315 = vld [vmem:[%s212 + $0x28] sm:$0xff]
      %v316 = vld [vmem:[%s212 + $0x30] sm:$0xff]
      %v317 = vld [vmem:[%s212 + $0x38] sm:$0xff]
      %v318 = vld [vmem:[%s212 + $0x40] sm:$0xff]
      %v319 = vld [vmem:[%s212 + $0x48] sm:$0xff]
      %v320 = vld [vmem:[%s212 + $0x50] sm:$0xff]
      %v321 = vld [vmem:[%s212 + $0x58] sm:$0xff]
      %v322 = vld [vmem:[%s212 + $0x60] sm:$0xff]
      %v323 = vld [vmem:[%s212 + $0x68] sm:$0xff]
      %v324 = vld [vmem:[%s212 + $0x70] sm:$0xff]
      %v325 = vld [vmem:[%s212 + $0x78] sm:$0xff]
      %327 = vset.pattern.permute.xlu0 0
      %328 = vperm.xlu0 %327, %v310
      %v329 = vpop.permute.xlu0 %328
      %332 = vset.pattern.permute.xlu0 0
      %333 = vperm.xlu0 %332, %v311
      %v334 = vpop.permute.xlu0 %333
      %337 = vset.pattern.permute.xlu0 0
      %338 = vperm.xlu0 %337, %v312
      %v339 = vpop.permute.xlu0 %338
      %342 = vset.pattern.permute.xlu0 0
      %343 = vperm.xlu0 %342, %v313
      %v344 = vpop.permute.xlu0 %343
      %347 = vset.pattern.permute.xlu0 0
      %348 = vperm.xlu0 %347, %v314
      %v349 = vpop.permute.xlu0 %348
      %352 = vset.pattern.permute.xlu0 0
      %353 = vperm.xlu0 %352, %v315
      %v354 = vpop.permute.xlu0 %353
      %357 = vset.pattern.permute.xlu0 0
      %358 = vperm.xlu0 %357, %v316
      %v359 = vpop.permute.xlu0 %358
      %362 = vset.pattern.permute.xlu0 0
      %363 = vperm.xlu0 %362, %v317
      %v364 = vpop.permute.xlu0 %363
      %367 = vset.pattern.permute.xlu0 0
      %368 = vperm.xlu0 %367, %v318
      %v369 = vpop.permute.xlu0 %368
      %372 = vset.pattern.permute.xlu0 0
      %373 = vperm.xlu0 %372, %v319
      %v374 = vpop.permute.xlu0 %373
      %377 = vset.pattern.permute.xlu0 0
      %378 = vperm.xlu0 %377, %v320
      %v379 = vpop.permute.xlu0 %378
      %382 = vset.pattern.permute.xlu0 0
      %383 = vperm.xlu0 %382, %v321
      %v384 = vpop.permute.xlu0 %383
      %387 = vset.pattern.permute.xlu0 0
      %388 = vperm.xlu0 %387, %v322
      %v389 = vpop.permute.xlu0 %388
      %392 = vset.pattern.permute.xlu0 0
      %393 = vperm.xlu0 %392, %v323
      %v394 = vpop.permute.xlu0 %393
      %397 = vset.pattern.permute.xlu0 0
      %398 = vperm.xlu0 %397, %v324
      %v399 = vpop.permute.xlu0 %398
      %402 = vset.pattern.permute.xlu0 0
      %403 = vperm.xlu0 %402, %v325
      %v404 = vpop.permute.xlu0 %403
      %v407 = vlaneseq
      %v408 = vshrl.u32 %v407, 7
      %v409 = vsub.s32 0, %v408
      %v410 = vrot.slane %v309, %v409
      %v411 = vlaneseq
      %v412 = vshrl.u32 %v411, 7
      %v413 = vsub.s32 1, %v412
      %v414 = vrot.slane %v309, %v413
      %v417 = vadd.f32 %v329, %v410
      %v418 = vadd.f32 %v329, %v414
      %v419 = vadd.f32 %v334, %v410
      %v420 = vadd.f32 %v334, %v414
      %v421 = vadd.f32 %v339, %v410
      %v422 = vadd.f32 %v339, %v414
      %v423 = vadd.f32 %v344, %v410
      %v424 = vadd.f32 %v344, %v414
      %v425 = vadd.f32 %v349, %v410
      %v426 = vadd.f32 %v349, %v414
      %v427 = vadd.f32 %v354, %v410
      %v428 = vadd.f32 %v354, %v414
      %v429 = vadd.f32 %v359, %v410
      %v430 = vadd.f32 %v359, %v414
      %v431 = vadd.f32 %v364, %v410
      %v432 = vadd.f32 %v364, %v414
      %v433 = vadd.f32 %v369, %v410
      %v434 = vadd.f32 %v369, %v414
      %v435 = vadd.f32 %v374, %v410
      %v436 = vadd.f32 %v374, %v414
      %v437 = vadd.f32 %v379, %v410
      %v438 = vadd.f32 %v379, %v414
      %v439 = vadd.f32 %v384, %v410
      %v440 = vadd.f32 %v384, %v414
      %v441 = vadd.f32 %v389, %v410
      %v442 = vadd.f32 %v389, %v414
      %v443 = vadd.f32 %v394, %v410
      %v444 = vadd.f32 %v394, %v414
      %v445 = vadd.f32 %v399, %v410
      %v446 = vadd.f32 %v399, %v414
      %v447 = vadd.f32 %v404, %v410
      %v448 = vadd.f32 %v404, %v414
      %v449 = vmul.f32 %v417, 0.01
      %v450 = vmul.f32 %v418, 0.01
      %v451 = vmul.f32 %v419, 0.01
      %v452 = vmul.f32 %v420, 0.01
      %v453 = vmul.f32 %v421, 0.01
      %v454 = vmul.f32 %v422, 0.01
      %v455 = vmul.f32 %v423, 0.01
      %v456 = vmul.f32 %v424, 0.01
      %v457 = vmul.f32 %v425, 0.01
      %v458 = vmul.f32 %v426, 0.01
      %v459 = vmul.f32 %v427, 0.01
      %v460 = vmul.f32 %v428, 0.01
      %v461 = vmul.f32 %v429, 0.01
      %v462 = vmul.f32 %v430, 0.01
      %v463 = vmul.f32 %v431, 0.01
      %v464 = vmul.f32 %v432, 0.01
      %v465 = vmul.f32 %v433, 0.01
      %v466 = vmul.f32 %v434, 0.01
      %v467 = vmul.f32 %v435, 0.01
      %v468 = vmul.f32 %v436, 0.01
      %v469 = vmul.f32 %v437, 0.01
      %v470 = vmul.f32 %v438, 0.01
      %v471 = vmul.f32 %v439, 0.01
      %v472 = vmul.f32 %v440, 0.01
      %v473 = vmul.f32 %v441, 0.01
      %v474 = vmul.f32 %v442, 0.01
      %v475 = vmul.f32 %v443, 0.01
      %v476 = vmul.f32 %v444, 0.01
      %v477 = vmul.f32 %v445, 0.01
      %v478 = vmul.f32 %v446, 0.01
      %v479 = vmul.f32 %v447, 0.01
      %v480 = vmul.f32 %v448, 0.01
      %v481 = vmax.f32 %v417, %v449
      %v482 = vmax.f32 %v418, %v450
      %v483 = vmax.f32 %v419, %v451
      %v484 = vmax.f32 %v420, %v452
      %v485 = vmax.f32 %v421, %v453
      %v486 = vmax.f32 %v422, %v454
      %v487 = vmax.f32 %v423, %v455
      %v488 = vmax.f32 %v424, %v456
      %v489 = vmax.f32 %v425, %v457
      %v490 = vmax.f32 %v426, %v458
      %v491 = vmax.f32 %v427, %v459
      %v492 = vmax.f32 %v428, %v460
      %v493 = vmax.f32 %v429, %v461
      %v494 = vmax.f32 %v430, %v462
      %v495 = vmax.f32 %v431, %v463
      %v496 = vmax.f32 %v432, %v464
      %v497 = vmax.f32 %v433, %v465
      %v498 = vmax.f32 %v434, %v466
      %v499 = vmax.f32 %v435, %v467
      %v500 = vmax.f32 %v436, %v468
      %v501 = vmax.f32 %v437, %v469
      %v502 = vmax.f32 %v438, %v470
      %v503 = vmax.f32 %v439, %v471
      %v504 = vmax.f32 %v440, %v472
      %v505 = vmax.f32 %v441, %v473
      %v506 = vmax.f32 %v442, %v474
      %v507 = vmax.f32 %v443, %v475
      %v508 = vmax.f32 %v444, %v476
      %v509 = vmax.f32 %v445, %v477
      %v510 = vmax.f32 %v446, %v478
      %v511 = vmax.f32 %v447, %v479
      %v512 = vmax.f32 %v448, %v480
      %v513 = vadd.f32 %v481, %v245
      %v514 = vadd.f32 %v482, %v246
      %v515 = vadd.f32 %v483, %v247
      %v516 = vadd.f32 %v484, %v248
      %v517 = vadd.f32 %v485, %v249
      %v518 = vadd.f32 %v486, %v250
      %v519 = vadd.f32 %v487, %v251
      %v520 = vadd.f32 %v488, %v252
      %v521 = vadd.f32 %v489, %v253
      %v522 = vadd.f32 %v490, %v254
      %v523 = vadd.f32 %v491, %v255
      %v524 = vadd.f32 %v492, %v256
      %v525 = vadd.f32 %v493, %v257
      %v526 = vadd.f32 %v494, %v258
      %v527 = vadd.f32 %v495, %v259
      %v528 = vadd.f32 %v496, %v260
      %v529 = vadd.f32 %v497, %v261
      %v530 = vadd.f32 %v498, %v262
      %v531 = vadd.f32 %v499, %v263
      %v532 = vadd.f32 %v500, %v264
      %v533 = vadd.f32 %v501, %v265
      %v534 = vadd.f32 %v502, %v266
      %v535 = vadd.f32 %v503, %v267
      %v536 = vadd.f32 %v504, %v268
      %v537 = vadd.f32 %v505, %v269
      %v538 = vadd.f32 %v506, %v270
      %v539 = vadd.f32 %v507, %v271
      %v540 = vadd.f32 %v508, %v272
      %v541 = vadd.f32 %v509, %v273
      %v542 = vadd.f32 %v510, %v274
      %v543 = vadd.f32 %v511, %v275
      %v544 = vadd.f32 %v512, %v276
      %v545 = vmax.f32 %v513, %v514
      %546 = vmax.xlane.f32.xlu0 %v545
      %v547 = vpop.xlane.xlu0 %546
      %v548 = vmax.f32 %v515, %v516
      %549 = vmax.xlane.f32.xlu0 %v548
      %v550 = vpop.xlane.xlu0 %549
      %v551 = vmax.f32 %v517, %v518
      %552 = vmax.xlane.f32.xlu0 %v551
      %v553 = vpop.xlane.xlu0 %552
      %v554 = vmax.f32 %v519, %v520
      %555 = vmax.xlane.f32.xlu0 %v554
      %v556 = vpop.xlane.xlu0 %555
      %v557 = vmax.f32 %v521, %v522
      %558 = vmax.xlane.f32.xlu0 %v557
      %v559 = vpop.xlane.xlu0 %558
      %v560 = vmax.f32 %v523, %v524
      %561 = vmax.xlane.f32.xlu0 %v560
      %v562 = vpop.xlane.xlu0 %561
      %v563 = vmax.f32 %v525, %v526
      %564 = vmax.xlane.f32.xlu0 %v563
      %v565 = vpop.xlane.xlu0 %564
      %v566 = vmax.f32 %v527, %v528
      %567 = vmax.xlane.f32.xlu0 %v566
      %v568 = vpop.xlane.xlu0 %567
      %v569 = vmax.f32 %v529, %v530
      %570 = vmax.xlane.f32.xlu0 %v569
      %v571 = vpop.xlane.xlu0 %570
      %v572 = vmax.f32 %v531, %v532
      %573 = vmax.xlane.f32.xlu0 %v572
      %v574 = vpop.xlane.xlu0 %573
      %v575 = vmax.f32 %v533, %v534
      %576 = vmax.xlane.f32.xlu0 %v575
      %v577 = vpop.xlane.xlu0 %576
      %v578 = vmax.f32 %v535, %v536
      %579 = vmax.xlane.f32.xlu0 %v578
      %v580 = vpop.xlane.xlu0 %579
      %v581 = vmax.f32 %v537, %v538
      %582 = vmax.xlane.f32.xlu0 %v581
      %v583 = vpop.xlane.xlu0 %582
      %v584 = vmax.f32 %v539, %v540
      %585 = vmax.xlane.f32.xlu0 %v584
      %v586 = vpop.xlane.xlu0 %585
      %v587 = vmax.f32 %v541, %v542
      %588 = vmax.xlane.f32.xlu0 %v587
      %v589 = vpop.xlane.xlu0 %588
      %v590 = vmax.f32 %v543, %v544
      %591 = vmax.xlane.f32.xlu0 %v590
      %v592 = vpop.xlane.xlu0 %591
      %v593 = vsub.f32 %v513, %v547
      %v594 = vsub.f32 %v514, %v547
      %v595 = vsub.f32 %v515, %v550
      %v596 = vsub.f32 %v516, %v550
      %v597 = vsub.f32 %v517, %v553
      %v598 = vsub.f32 %v518, %v553
      %v599 = vsub.f32 %v519, %v556
      %v600 = vsub.f32 %v520, %v556
      %v601 = vsub.f32 %v521, %v559
      %v602 = vsub.f32 %v522, %v559
      %v603 = vsub.f32 %v523, %v562
      %v604 = vsub.f32 %v524, %v562
      %v605 = vsub.f32 %v525, %v565
      %v606 = vsub.f32 %v526, %v565
      %v607 = vsub.f32 %v527, %v568
      %v608 = vsub.f32 %v528, %v568
      %v609 = vsub.f32 %v529, %v571
      %v610 = vsub.f32 %v530, %v571
      %v611 = vsub.f32 %v531, %v574
      %v612 = vsub.f32 %v532, %v574
      %v613 = vsub.f32 %v533, %v577
      %v614 = vsub.f32 %v534, %v577
      %v615 = vsub.f32 %v535, %v580
      %v616 = vsub.f32 %v536, %v580
      %v617 = vsub.f32 %v537, %v583
      %v618 = vsub.f32 %v538, %v583
      %v619 = vsub.f32 %v539, %v586
      %v620 = vsub.f32 %v540, %v586
      %v621 = vsub.f32 %v541, %v589
      %v622 = vsub.f32 %v542, %v589
      %v623 = vsub.f32 %v543, %v592
      %v624 = vsub.f32 %v544, %v592
      %v625 = vmul.f32 %v593, 1.442695
      %v626 = vpow.pop %v625
      %v627 = vmul.f32 %v594, 1.442695
      %v628 = vpow.pop %v627
      %v629 = vmul.f32 %v595, 1.442695
      %v630 = vpow.pop %v629
      %v631 = vmul.f32 %v596, 1.442695
      %v632 = vpow.pop %v631
      %v633 = vmul.f32 %v597, 1.442695
      %v634 = vpow.pop %v633
      %v635 = vmul.f32 %v598, 1.442695
      %v636 = vpow.pop %v635
      %v637 = vmul.f32 %v599, 1.442695
      %v638 = vpow.pop %v637
      %v639 = vmul.f32 %v600, 1.442695
      %v640 = vpow.pop %v639
      %v641 = vmul.f32 %v601, 1.442695
      %v642 = vpow.pop %v641
      %v643 = vmul.f32 %v602, 1.442695
      %v644 = vpow.pop %v643
      %v645 = vmul.f32 %v603, 1.442695
      %v646 = vpow.pop %v645
      %v647 = vmul.f32 %v604, 1.442695
      %v648 = vpow.pop %v647
      %v649 = vmul.f32 %v605, 1.442695
      %v650 = vpow.pop %v649
      %v651 = vmul.f32 %v606, 1.442695
      %v652 = vpow.pop %v651
      %v653 = vmul.f32 %v607, 1.442695
      %v654 = vpow.pop %v653
      %v655 = vmul.f32 %v608, 1.442695
      %v656 = vpow.pop %v655
      %v657 = vmul.f32 %v609, 1.442695
      %v658 = vpow.pop %v657
      %v659 = vmul.f32 %v610, 1.442695
      %v660 = vpow.pop %v659
      %v661 = vmul.f32 %v611, 1.442695
      %v662 = vpow.pop %v661
      %v663 = vmul.f32 %v612, 1.442695
      %v664 = vpow.pop %v663
      %v665 = vmul.f32 %v613, 1.442695
      %v666 = vpow.pop %v665
      %v667 = vmul.f32 %v614, 1.442695
      %v668 = vpow.pop %v667
      %v669 = vmul.f32 %v615, 1.442695
      %v670 = vpow.pop %v669
      %v671 = vmul.f32 %v616, 1.442695
      %v672 = vpow.pop %v671
      %v673 = vmul.f32 %v617, 1.442695
      %v674 = vpow.pop %v673
      %v675 = vmul.f32 %v618, 1.442695
      %v676 = vpow.pop %v675
      %v677 = vmul.f32 %v619, 1.442695
      %v678 = vpow.pop %v677
      %v679 = vmul.f32 %v620, 1.442695
      %v680 = vpow.pop %v679
      %v681 = vmul.f32 %v621, 1.442695
      %v682 = vpow.pop %v681
      %v683 = vmul.f32 %v622, 1.442695
      %v684 = vpow.pop %v683
      %v685 = vmul.f32 %v623, 1.442695
      %v686 = vpow.pop %v685
      %v687 = vmul.f32 %v624, 1.442695
      %v688 = vpow.pop %v687
      %v689 = vadd.f32 %v626, %v628
      %690 = vadd.xlane.f32.xlu0 %v689
      %v691 = vpop.xlane.xlu0 %690
      %v692 = vadd.f32 %v630, %v632
      %693 = vadd.xlane.f32.xlu0 %v692
      %v694 = vpop.xlane.xlu0 %693
      %v695 = vadd.f32 %v634, %v636
      %696 = vadd.xlane.f32.xlu0 %v695
      %v697 = vpop.xlane.xlu0 %696
      %v698 = vadd.f32 %v638, %v640
      %699 = vadd.xlane.f32.xlu0 %v698
      %v700 = vpop.xlane.xlu0 %699
      %v701 = vadd.f32 %v642, %v644
      %702 = vadd.xlane.f32.xlu0 %v701
      %v703 = vpop.xlane.xlu0 %702
      %v704 = vadd.f32 %v646, %v648
      %705 = vadd.xlane.f32.xlu0 %v704
      %v706 = vpop.xlane.xlu0 %705
      %v707 = vadd.f32 %v650, %v652
      %708 = vadd.xlane.f32.xlu0 %v707
      %v709 = vpop.xlane.xlu0 %708
      %v710 = vadd.f32 %v654, %v656
      %711 = vadd.xlane.f32.xlu0 %v710
      %v712 = vpop.xlane.xlu0 %711
      %v713 = vadd.f32 %v658, %v660
      %714 = vadd.xlane.f32.xlu0 %v713
      %v715 = vpop.xlane.xlu0 %714
      %v716 = vadd.f32 %v662, %v664
      %717 = vadd.xlane.f32.xlu0 %v716
      %v718 = vpop.xlane.xlu0 %717
      %v719 = vadd.f32 %v666, %v668
      %720 = vadd.xlane.f32.xlu0 %v719
      %v721 = vpop.xlane.xlu0 %720
      %v722 = vadd.f32 %v670, %v672
      %723 = vadd.xlane.f32.xlu0 %v722
      %v724 = vpop.xlane.xlu0 %723
      %v725 = vadd.f32 %v674, %v676
      %726 = vadd.xlane.f32.xlu0 %v725
      %v727 = vpop.xlane.xlu0 %726
      %v728 = vadd.f32 %v678, %v680
      %729 = vadd.xlane.f32.xlu0 %v728
      %v730 = vpop.xlane.xlu0 %729
      %v731 = vadd.f32 %v682, %v684
      %732 = vadd.xlane.f32.xlu0 %v731
      %v733 = vpop.xlane.xlu0 %732
      %v734 = vadd.f32 %v686, %v688
      %735 = vadd.xlane.f32.xlu0 %v734
      %v736 = vpop.xlane.xlu0 %735
      %v737 = vmax.f32 %v691, 1e-20
      %v738 = vmax.f32 %v694, 1e-20
      %v739 = vmax.f32 %v697, 1e-20
      %v740 = vmax.f32 %v700, 1e-20
      %v741 = vmax.f32 %v703, 1e-20
      %v742 = vmax.f32 %v706, 1e-20
      %v743 = vmax.f32 %v709, 1e-20
      %v744 = vmax.f32 %v712, 1e-20
      %v745 = vmax.f32 %v715, 1e-20
      %v746 = vmax.f32 %v718, 1e-20
      %v747 = vmax.f32 %v721, 1e-20
      %v748 = vmax.f32 %v724, 1e-20
      %v749 = vmax.f32 %v727, 1e-20
      %v750 = vmax.f32 %v730, 1e-20
      %v751 = vmax.f32 %v733, 1e-20
      %v752 = vmax.f32 %v736, 1e-20
      %v753 = vpack.c.bf16 %v630, %v626
      %v754 = vpack.c.bf16 %v632, %v628
      %v755 = vpack.c.bf16 %v638, %v634
      %v756 = vpack.c.bf16 %v640, %v636
      %v757 = vpack.c.bf16 %v646, %v642
      %v758 = vpack.c.bf16 %v648, %v644
      %v759 = vpack.c.bf16 %v654, %v650
      %v760 = vpack.c.bf16 %v656, %v652
      %v761 = vpack.c.bf16 %v662, %v658
      %v762 = vpack.c.bf16 %v664, %v660
      %v763 = vpack.c.bf16 %v670, %v666
      %v764 = vpack.c.bf16 %v672, %v668
      %v765 = vpack.c.bf16 %v678, %v674
      %v766 = vpack.c.bf16 %v680, %v676
      %v767 = vpack.c.bf16 %v686, %v682
      %v768 = vpack.c.bf16 %v688, %v684
      %v801 = vunpack.c.l.b16 %v277
      %v802 = vunpack.c.l.b16 %v278
      %v803 = vunpack.c.l.b16 %v279
      %v804 = vunpack.c.l.b16 %v280
      %v805 = vunpack.c.l.b16 %v281
      %v806 = vunpack.c.l.b16 %v282
      %v807 = vunpack.c.l.b16 %v283
      %v808 = vunpack.c.l.b16 %v284
      %v809 = vunpack.c.l.b16 %v285
      %v810 = vunpack.c.l.b16 %v286
      %v811 = vunpack.c.l.b16 %v287
      %v812 = vunpack.c.l.b16 %v288
      %v813 = vunpack.c.l.b16 %v289
      %v814 = vunpack.c.l.b16 %v290
      %v815 = vunpack.c.l.b16 %v291
      %v816 = vunpack.c.l.b16 %v292
      %v817 = vunpack.c.l.b16 %v293
      %v818 = vunpack.c.l.b16 %v294
      %v819 = vunpack.c.l.b16 %v295
      %v820 = vunpack.c.l.b16 %v296
      %v821 = vunpack.c.l.b16 %v297
      %v822 = vunpack.c.l.b16 %v298
      %v823 = vunpack.c.l.b16 %v299
      %v824 = vunpack.c.l.b16 %v300
      %v825 = vunpack.c.l.b16 %v301
      %v826 = vunpack.c.l.b16 %v302
      %v827 = vunpack.c.l.b16 %v303
      %v828 = vunpack.c.l.b16 %v304
      %v829 = vunpack.c.l.b16 %v305
      %v830 = vunpack.c.l.b16 %v306
      %v831 = vunpack.c.l.b16 %v307
      %v832 = vunpack.c.l.b16 %v308
      %v833 = vpack.c.b16 %v802, %v801
      %v834 = vpack.c.b16 %v804, %v803
      %v835 = vpack.c.b16 %v806, %v805
      %v836 = vpack.c.b16 %v808, %v807
      %v837 = vpack.c.b16 %v810, %v809
      %v838 = vpack.c.b16 %v812, %v811
      %v839 = vpack.c.b16 %v814, %v813
      %v840 = vpack.c.b16 %v816, %v815
      %v841 = vpack.c.b16 %v818, %v817
      %v842 = vpack.c.b16 %v820, %v819
      %v843 = vpack.c.b16 %v822, %v821
      %v844 = vpack.c.b16 %v824, %v823
      %v845 = vpack.c.b16 %v826, %v825
      %v846 = vpack.c.b16 %v828, %v827
      %v847 = vpack.c.b16 %v830, %v829
      %v848 = vpack.c.b16 %v832, %v831
      %865 = vmatprep.subr.bf16.mxu0 0
      %866 = vmatpush1.bf16.msra.mxu0 %v833
      %867 = vmatprep.subr.bf16.mxu0 0
      %868 = vmatpush1.bf16.msra.mxu0 %v834
      %869 = vmatprep.subr.bf16.mxu0 0
      %870 = vmatpush1.bf16.msra.mxu0 %v835
      %871 = vmatprep.subr.bf16.mxu0 0
      %872 = vmatpush1.bf16.msra.mxu0 %v836
      %873 = vmatprep.subr.bf16.mxu0 0
      %874 = vmatpush1.bf16.msra.mxu0 %v837
      %875 = vmatprep.subr.bf16.mxu0 0
      %876 = vmatpush1.bf16.msra.mxu0 %v838
      %877 = vmatprep.subr.bf16.mxu0 0
      %878 = vmatpush1.bf16.msra.mxu0 %v839
      %879 = vmatprep.subr.bf16.mxu0 0
      %880 = vmatpush1.bf16.msra.mxu0 %v840
      %881 = vmatprep.subr.bf16.mxu0 0
      %882 = vmatpush1.bf16.msra.mxu0 %v841
      %883 = vmatprep.subr.bf16.mxu0 0
      %884 = vmatpush1.bf16.msra.mxu0 %v842
      %885 = vmatprep.subr.bf16.mxu0 0
      %886 = vmatpush1.bf16.msra.mxu0 %v843
      %887 = vmatprep.subr.bf16.mxu0 0
      %888 = vmatpush1.bf16.msra.mxu0 %v844
      %889 = vmatprep.subr.bf16.mxu0 0
      %890 = vmatpush1.bf16.msra.mxu0 %v845
      %891 = vmatprep.subr.bf16.mxu0 0
      %892 = vmatpush1.bf16.msra.mxu0 %v846
      %893 = vmatprep.subr.bf16.mxu0 0
      %894 = vmatpush1.bf16.msra.mxu0 %v847
      %895 = vmatprep.subr.bf16.mxu0 0
      %896 = vmatpush1.bf16.msra.mxu0 %v848
      %897 = vmatprep.mubr.bf16.mxu0 %v754
      %898 = vmatmul.mubr.bf16.gmra.mrb[0].mxu0 %v753
      %v899 = vpop.f32.mrb[0].mxu0
      %v900 = vadd.f32 0.0, %v899
      %v901 = vpop.f32.mrb[0].mxu0
      %v902 = vpop.f32.mrb[0].mxu0
      %v903 = vadd.f32 0.0, %v902
      %v904 = vpop.f32.mrb[0].mxu0
      %905 = vmatprep.mubr.bf16.mxu0 %v756
      %906 = vmatmul.mubr.bf16.gmra.mrb[0].mxu0 %v755
      %v907 = vpop.f32.mrb[0].mxu0
      %v908 = vadd.f32 0.0, %v907
      %v909 = vpop.f32.mrb[0].mxu0
      %v910 = vpop.f32.mrb[0].mxu0
      %v911 = vadd.f32 0.0, %v910
      %v912 = vpop.f32.mrb[0].mxu0
      %913 = vmatprep.mubr.bf16.mxu0 %v758
      %914 = vmatmul.mubr.bf16.gmra.mrb[0].mxu0 %v757
      %v915 = vpop.f32.mrb[0].mxu0
      %v916 = vadd.f32 0.0, %v915
      %v917 = vpop.f32.mrb[0].mxu0
      %v918 = vpop.f32.mrb[0].mxu0
      %v919 = vadd.f32 0.0, %v918
      %v920 = vpop.f32.mrb[0].mxu0
      %921 = vmatprep.mubr.bf16.mxu0 %v760
      %922 = vmatmul.mubr.bf16.gmra.mrb[0].mxu0 %v759
      %v923 = vpop.f32.mrb[0].mxu0
      %v924 = vadd.f32 0.0, %v923
      %v925 = vpop.f32.mrb[0].mxu0
      %v926 = vpop.f32.mrb[0].mxu0
      %v927 = vadd.f32 0.0, %v926
      %v928 = vpop.f32.mrb[0].mxu0
      %929 = vmatprep.mubr.bf16.mxu0 %v762
      %930 = vmatmul.mubr.bf16.gmra.mrb[0].mxu0 %v761
      %v931 = vpop.f32.mrb[0].mxu0
      %v932 = vadd.f32 0.0, %v931
      %v933 = vpop.f32.mrb[0].mxu0
      %v934 = vpop.f32.mrb[0].mxu0
      %v935 = vadd.f32 0.0, %v934
      %v936 = vpop.f32.mrb[0].mxu0
      %937 = vmatprep.mubr.bf16.mxu0 %v764
      %938 = vmatmul.mubr.bf16.gmra.mrb[0].mxu0 %v763
      %v939 = vpop.f32.mrb[0].mxu0
      %v940 = vadd.f32 0.0, %v939
      %v941 = vpop.f32.mrb[0].mxu0
      %v942 = vpop.f32.mrb[0].mxu0
      %v943 = vadd.f32 0.0, %v942
      %v944 = vpop.f32.mrb[0].mxu0
      %945 = vmatprep.mubr.bf16.mxu0 %v766
      %946 = vmatmul.mubr.bf16.gmra.mrb[0].mxu0 %v765
      %v947 = vpop.f32.mrb[0].mxu0
      %v948 = vadd.f32 0.0, %v947
      %v949 = vpop.f32.mrb[0].mxu0
      %v950 = vpop.f32.mrb[0].mxu0
      %v951 = vadd.f32 0.0, %v950
      %v952 = vpop.f32.mrb[0].mxu0
      %953 = vmatprep.mubr.bf16.mxu0 %v768
      %954 = vmatmul.mubr.bf16.gmra.mrb[0].mxu0 %v767
      %v955 = vpop.f32.mrb[0].mxu0
      %v956 = vadd.f32 0.0, %v955
      %v957 = vpop.f32.mrb[0].mxu0
      %v958 = vpop.f32.mrb[0].mxu0
      %v959 = vadd.f32 0.0, %v958
      %v960 = vpop.f32.mrb[0].mxu0
      %961 = vdwg.mxu0
      %v962 = vrcp.pop %v737
      %v963 = vrcp.pop %v738
      %v964 = vrcp.pop %v739
      %v965 = vrcp.pop %v740
      %v966 = vrcp.pop %v741
      %v967 = vrcp.pop %v742
      %v968 = vrcp.pop %v743
      %v969 = vrcp.pop %v744
      %v970 = vrcp.pop %v745
      %v971 = vrcp.pop %v746
      %v972 = vrcp.pop %v747
      %v973 = vrcp.pop %v748
      %v974 = vrcp.pop %v749
      %v975 = vrcp.pop %v750
      %v976 = vrcp.pop %v751
      %v977 = vrcp.pop %v752
      %v978 = vmul.f32 %v900, %v962
      %v979 = vmul.f32 %v903, %v963
      %v980 = vmul.f32 %v908, %v964
      %v981 = vmul.f32 %v911, %v965
      %v982 = vmul.f32 %v916, %v966
      %v983 = vmul.f32 %v919, %v967
      %v984 = vmul.f32 %v924, %v968
      %v985 = vmul.f32 %v927, %v969
      %v986 = vmul.f32 %v932, %v970
      %v987 = vmul.f32 %v935, %v971
      %v988 = vmul.f32 %v940, %v972
      %v989 = vmul.f32 %v943, %v973
      %v990 = vmul.f32 %v948, %v974
      %v991 = vmul.f32 %v951, %v975
      %v992 = vmul.f32 %v956, %v976
      %v993 = vmul.f32 %v959, %v977
      %vm994 = vcmp.gt.f32.partialorder %v978, 0.0
      %vm995 = vcmp.gt.f32.partialorder %v979, 0.0
      %vm996 = vcmp.gt.f32.partialorder %v980, 0.0
      %vm997 = vcmp.gt.f32.partialorder %v981, 0.0
      %vm998 = vcmp.gt.f32.partialorder %v982, 0.0
      %vm999 = vcmp.gt.f32.partialorder %v983, 0.0
      %vm1000 = vcmp.gt.f32.partialorder %v984, 0.0
      %vm1001 = vcmp.gt.f32.partialorder %v985, 0.0
      %vm1002 = vcmp.gt.f32.partialorder %v986, 0.0
      %vm1003 = vcmp.gt.f32.partialorder %v987, 0.0
      %vm1004 = vcmp.gt.f32.partialorder %v988, 0.0
      %vm1005 = vcmp.gt.f32.partialorder %v989, 0.0
      %vm1006 = vcmp.gt.f32.partialorder %v990, 0.0
      %vm1007 = vcmp.gt.f32.partialorder %v991, 0.0
      %vm1008 = vcmp.gt.f32.partialorder %v992, 0.0
      %vm1009 = vcmp.gt.f32.partialorder %v993, 0.0
      %v1010 = vmin.f32 %v978, 0.0
      %v1011 = vmin.f32 %v979, 0.0
      %v1012 = vmin.f32 %v980, 0.0
      %v1013 = vmin.f32 %v981, 0.0
      %v1014 = vmin.f32 %v982, 0.0
      %v1015 = vmin.f32 %v983, 0.0
      %v1016 = vmin.f32 %v984, 0.0
      %v1017 = vmin.f32 %v985, 0.0
      %v1018 = vmin.f32 %v986, 0.0
      %v1019 = vmin.f32 %v987, 0.0
      %v1020 = vmin.f32 %v988, 0.0
      %v1021 = vmin.f32 %v989, 0.0
      %v1022 = vmin.f32 %v990, 0.0
      %v1023 = vmin.f32 %v991, 0.0
      %v1024 = vmin.f32 %v992, 0.0
      %v1025 = vmin.f32 %v993, 0.0
      %v1026 = vmul.f32 %v1010, 1.442695
      %v1027 = vpow.pop %v1026
      %v1028 = vmul.f32 %v1011, 1.442695
      %v1029 = vpow.pop %v1028
      %v1030 = vmul.f32 %v1012, 1.442695
      %v1031 = vpow.pop %v1030
      %v1032 = vmul.f32 %v1013, 1.442695
      %v1033 = vpow.pop %v1032
      %v1034 = vmul.f32 %v1014, 1.442695
      %v1035 = vpow.pop %v1034
      %v1036 = vmul.f32 %v1015, 1.442695
      %v1037 = vpow.pop %v1036
      %v1038 = vmul.f32 %v1016, 1.442695
      %v1039 = vpow.pop %v1038
      %v1040 = vmul.f32 %v1017, 1.442695
      %v1041 = vpow.pop %v1040
      %v1042 = vmul.f32 %v1018, 1.442695
      %v1043 = vpow.pop %v1042
      %v1044 = vmul.f32 %v1019, 1.442695
      %v1045 = vpow.pop %v1044
      %v1046 = vmul.f32 %v1020, 1.442695
      %v1047 = vpow.pop %v1046
      %v1048 = vmul.f32 %v1021, 1.442695
      %v1049 = vpow.pop %v1048
      %v1050 = vmul.f32 %v1022, 1.442695
      %v1051 = vpow.pop %v1050
      %v1052 = vmul.f32 %v1023, 1.442695
      %v1053 = vpow.pop %v1052
      %v1054 = vmul.f32 %v1024, 1.442695
      %v1055 = vpow.pop %v1054
      %v1056 = vmul.f32 %v1025, 1.442695
      %v1057 = vpow.pop %v1056
      %v1058 = vsub.f32 %v1027, 1.0
      %v1059 = vsub.f32 %v1029, 1.0
      %v1060 = vsub.f32 %v1031, 1.0
      %v1061 = vsub.f32 %v1033, 1.0
      %v1062 = vsub.f32 %v1035, 1.0
      %v1063 = vsub.f32 %v1037, 1.0
      %v1064 = vsub.f32 %v1039, 1.0
      %v1065 = vsub.f32 %v1041, 1.0
      %v1066 = vsub.f32 %v1043, 1.0
      %v1067 = vsub.f32 %v1045, 1.0
      %v1068 = vsub.f32 %v1047, 1.0
      %v1069 = vsub.f32 %v1049, 1.0
      %v1070 = vsub.f32 %v1051, 1.0
      %v1071 = vsub.f32 %v1053, 1.0
      %v1072 = vsub.f32 %v1055, 1.0
      %v1073 = vsub.f32 %v1057, 1.0
      %v1074 = vsel %vm994, %v978, %v1058
      %v1075 = vsel %vm995, %v979, %v1059
      %v1076 = vsel %vm996, %v980, %v1060
      %v1077 = vsel %vm997, %v981, %v1061
      %v1078 = vsel %vm998, %v982, %v1062
      %v1079 = vsel %vm999, %v983, %v1063
      %v1080 = vsel %vm1000, %v984, %v1064
      %v1081 = vsel %vm1001, %v985, %v1065
      %v1082 = vsel %vm1002, %v986, %v1066
      %v1083 = vsel %vm1003, %v987, %v1067
      %v1084 = vsel %vm1004, %v988, %v1068
      %v1085 = vsel %vm1005, %v989, %v1069
      %v1086 = vsel %vm1006, %v990, %v1070
      %v1087 = vsel %vm1007, %v991, %v1071
      %v1088 = vsel %vm1008, %v992, %v1072
      %v1089 = vsel %vm1009, %v993, %v1073
      %v1090 = vpack.c.bf16 %v1075, %v1074
      %v1091 = vpack.c.bf16 %v1077, %v1076
      %v1092 = vpack.c.bf16 %v1079, %v1078
      %v1093 = vpack.c.bf16 %v1081, %v1080
      %v1094 = vpack.c.bf16 %v1083, %v1082
      %v1095 = vpack.c.bf16 %v1085, %v1084
      %v1096 = vpack.c.bf16 %v1087, %v1086
      %v1097 = vpack.c.bf16 %v1089, %v1088
      %1098 = vst [vmem:[%s226] sm:$0xff] %v1090
      %1099 = vst [vmem:[%s226 + $0x10] sm:$0xff] %v1091
      %1100 = vst [vmem:[%s226 + $0x20] sm:$0xff] %v1092
      %1101 = vst [vmem:[%s226 + $0x30] sm:$0xff] %v1093
      %1102 = vst [vmem:[%s226 + $0x40] sm:$0xff] %v1094
      %1103 = vst [vmem:[%s226 + $0x50] sm:$0xff] %v1095
      %1104 = vst [vmem:[%s226 + $0x60] sm:$0xff] %v1096
      %1105 = vst [vmem:[%s226 + $0x70] sm:$0xff] %v1097
      %v1106 = vld [vmem:[%s0 + $0x4] sm:$0xf]
      %v1107 = vld [vmem:[%s0 + $0xc] sm:$0xf]
      %v1108 = vld [vmem:[%s0 + $0x14] sm:$0xf]
      %v1109 = vld [vmem:[%s0 + $0x1c] sm:$0xf]
      %v1110 = vld [vmem:[%s0 + $0x24] sm:$0xf]
      %v1111 = vld [vmem:[%s0 + $0x2c] sm:$0xf]
      %v1112 = vld [vmem:[%s0 + $0x34] sm:$0xf]
      %v1113 = vld [vmem:[%s0 + $0x3c] sm:$0xf]
      %v1114 = vld [vmem:[%s0 + $0x44] sm:$0xf]
      %v1115 = vld [vmem:[%s0 + $0x4c] sm:$0xf]
      %v1116 = vld [vmem:[%s0 + $0x54] sm:$0xf]
      %v1117 = vld [vmem:[%s0 + $0x5c] sm:$0xf]
      %v1118 = vld [vmem:[%s0 + $0x64] sm:$0xf]
      %v1119 = vld [vmem:[%s0 + $0x6c] sm:$0xf]
      %v1120 = vld [vmem:[%s0 + $0x74] sm:$0xf]
      %v1121 = vld [vmem:[%s0 + $0x7c] sm:$0xf]
      %v1122 = vld [vmem:[%s0 + $0x84] sm:$0xf]
      %v1123 = vld [vmem:[%s0 + $0x8c] sm:$0xf]
      %v1124 = vld [vmem:[%s0 + $0x94] sm:$0xf]
      %v1125 = vld [vmem:[%s0 + $0x9c] sm:$0xf]
      %v1126 = vld [vmem:[%s0 + $0xa4] sm:$0xf]
      %v1127 = vld [vmem:[%s0 + $0xac] sm:$0xf]
      %v1128 = vld [vmem:[%s0 + $0xb4] sm:$0xf]
      %v1129 = vld [vmem:[%s0 + $0xbc] sm:$0xf]
      %v1130 = vld [vmem:[%s0 + $0xc4] sm:$0xf]
      %v1131 = vld [vmem:[%s0 + $0xcc] sm:$0xf]
      %v1132 = vld [vmem:[%s0 + $0xd4] sm:$0xf]
      %v1133 = vld [vmem:[%s0 + $0xdc] sm:$0xf]
      %v1134 = vld [vmem:[%s0 + $0xe4] sm:$0xf]
      %v1135 = vld [vmem:[%s0 + $0xec] sm:$0xf]
      %v1136 = vld [vmem:[%s0 + $0xf4] sm:$0xf]
      %v1137 = vld [vmem:[%s0 + $0xfc] sm:$0xf]
      %s1138 = scalar_lea.vmem %s1, 1
      %v1139 = vld [vmem:[%s1138] ss:$2 sm:$0x3]
      %v1140 = vld [vmem:[%s212] sm:$0xff]
      %v1141 = vld [vmem:[%s212 + $0x8] sm:$0xff]
      %v1142 = vld [vmem:[%s212 + $0x10] sm:$0xff]
      %v1143 = vld [vmem:[%s212 + $0x18] sm:$0xff]
      %v1144 = vld [vmem:[%s212 + $0x20] sm:$0xff]
      %v1145 = vld [vmem:[%s212 + $0x28] sm:$0xff]
      %v1146 = vld [vmem:[%s212 + $0x30] sm:$0xff]
      %v1147 = vld [vmem:[%s212 + $0x38] sm:$0xff]
      %v1148 = vld [vmem:[%s212 + $0x40] sm:$0xff]
      %v1149 = vld [vmem:[%s212 + $0x48] sm:$0xff]
      %v1150 = vld [vmem:[%s212 + $0x50] sm:$0xff]
      %v1151 = vld [vmem:[%s212 + $0x58] sm:$0xff]
      %v1152 = vld [vmem:[%s212 + $0x60] sm:$0xff]
      %v1153 = vld [vmem:[%s212 + $0x68] sm:$0xff]
      %v1154 = vld [vmem:[%s212 + $0x70] sm:$0xff]
      %v1155 = vld [vmem:[%s212 + $0x78] sm:$0xff]
      %1157 = vset.pattern.permute.xlu0 1
      %1158 = vperm.xlu0 %1157, %v1140
      %v1159 = vpop.permute.xlu0 %1158
      %1162 = vset.pattern.permute.xlu0 1
      %1163 = vperm.xlu0 %1162, %v1141
      %v1164 = vpop.permute.xlu0 %1163
      %1167 = vset.pattern.permute.xlu0 1
      %1168 = vperm.xlu0 %1167, %v1142
      %v1169 = vpop.permute.xlu0 %1168
      %1172 = vset.pattern.permute.xlu0 1
      %1173 = vperm.xlu0 %1172, %v1143
      %v1174 = vpop.permute.xlu0 %1173
      %1177 = vset.pattern.permute.xlu0 1
      %1178 = vperm.xlu0 %1177, %v1144
      %v1179 = vpop.permute.xlu0 %1178
      %1182 = vset.pattern.permute.xlu0 1
      %1183 = vperm.xlu0 %1182, %v1145
      %v1184 = vpop.permute.xlu0 %1183
      %1187 = vset.pattern.permute.xlu0 1
      %1188 = vperm.xlu0 %1187, %v1146
      %v1189 = vpop.permute.xlu0 %1188
      %1192 = vset.pattern.permute.xlu0 1
      %1193 = vperm.xlu0 %1192, %v1147
      %v1194 = vpop.permute.xlu0 %1193
      %1197 = vset.pattern.permute.xlu0 1
      %1198 = vperm.xlu0 %1197, %v1148
      %v1199 = vpop.permute.xlu0 %1198
      %1202 = vset.pattern.permute.xlu0 1
      %1203 = vperm.xlu0 %1202, %v1149
      %v1204 = vpop.permute.xlu0 %1203
      %1207 = vset.pattern.permute.xlu0 1
      %1208 = vperm.xlu0 %1207, %v1150
      %v1209 = vpop.permute.xlu0 %1208
      %1212 = vset.pattern.permute.xlu0 1
      %1213 = vperm.xlu0 %1212, %v1151
      %v1214 = vpop.permute.xlu0 %1213
      %1217 = vset.pattern.permute.xlu0 1
      %1218 = vperm.xlu0 %1217, %v1152
      %v1219 = vpop.permute.xlu0 %1218
      %1222 = vset.pattern.permute.xlu0 1
      %1223 = vperm.xlu0 %1222, %v1153
      %v1224 = vpop.permute.xlu0 %1223
      %1227 = vset.pattern.permute.xlu0 1
      %1228 = vperm.xlu0 %1227, %v1154
      %v1229 = vpop.permute.xlu0 %1228
      %1232 = vset.pattern.permute.xlu0 1
      %1233 = vperm.xlu0 %1232, %v1155
      %v1234 = vpop.permute.xlu0 %1233
      %v1237 = vlaneseq
      %v1238 = vshrl.u32 %v1237, 7
      %v1239 = vsub.s32 0, %v1238
      %v1240 = vrot.slane %v1139, %v1239
      %v1241 = vlaneseq
      %v1242 = vshrl.u32 %v1241, 7
      %v1243 = vsub.s32 1, %v1242
      %v1244 = vrot.slane %v1139, %v1243
      %v1247 = vadd.f32 %v1159, %v1240
      %v1248 = vadd.f32 %v1159, %v1244
      %v1249 = vadd.f32 %v1164, %v1240
      %v1250 = vadd.f32 %v1164, %v1244
      %v1251 = vadd.f32 %v1169, %v1240
      %v1252 = vadd.f32 %v1169, %v1244
      %v1253 = vadd.f32 %v1174, %v1240
      %v1254 = vadd.f32 %v1174, %v1244
      %v1255 = vadd.f32 %v1179, %v1240
      %v1256 = vadd.f32 %v1179, %v1244
      %v1257 = vadd.f32 %v1184, %v1240
      %v1258 = vadd.f32 %v1184, %v1244
      %v1259 = vadd.f32 %v1189, %v1240
      %v1260 = vadd.f32 %v1189, %v1244
      %v1261 = vadd.f32 %v1194, %v1240
      %v1262 = vadd.f32 %v1194, %v1244
      %v1263 = vadd.f32 %v1199, %v1240
      %v1264 = vadd.f32 %v1199, %v1244
      %v1265 = vadd.f32 %v1204, %v1240
      %v1266 = vadd.f32 %v1204, %v1244
      %v1267 = vadd.f32 %v1209, %v1240
      %v1268 = vadd.f32 %v1209, %v1244
      %v1269 = vadd.f32 %v1214, %v1240
      %v1270 = vadd.f32 %v1214, %v1244
      %v1271 = vadd.f32 %v1219, %v1240
      %v1272 = vadd.f32 %v1219, %v1244
      %v1273 = vadd.f32 %v1224, %v1240
      %v1274 = vadd.f32 %v1224, %v1244
      %v1275 = vadd.f32 %v1229, %v1240
      %v1276 = vadd.f32 %v1229, %v1244
      %v1277 = vadd.f32 %v1234, %v1240
      %v1278 = vadd.f32 %v1234, %v1244
      %v1279 = vmul.f32 %v1247, 0.01
      %v1280 = vmul.f32 %v1248, 0.01
      %v1281 = vmul.f32 %v1249, 0.01
      %v1282 = vmul.f32 %v1250, 0.01
      %v1283 = vmul.f32 %v1251, 0.01
      %v1284 = vmul.f32 %v1252, 0.01
      %v1285 = vmul.f32 %v1253, 0.01
      %v1286 = vmul.f32 %v1254, 0.01
      %v1287 = vmul.f32 %v1255, 0.01
      %v1288 = vmul.f32 %v1256, 0.01
      %v1289 = vmul.f32 %v1257, 0.01
      %v1290 = vmul.f32 %v1258, 0.01
      %v1291 = vmul.f32 %v1259, 0.01
      %v1292 = vmul.f32 %v1260, 0.01
      %v1293 = vmul.f32 %v1261, 0.01
      %v1294 = vmul.f32 %v1262, 0.01
      %v1295 = vmul.f32 %v1263, 0.01
      %v1296 = vmul.f32 %v1264, 0.01
      %v1297 = vmul.f32 %v1265, 0.01
      %v1298 = vmul.f32 %v1266, 0.01
      %v1299 = vmul.f32 %v1267, 0.01
      %v1300 = vmul.f32 %v1268, 0.01
      %v1301 = vmul.f32 %v1269, 0.01
      %v1302 = vmul.f32 %v1270, 0.01
      %v1303 = vmul.f32 %v1271, 0.01
      %v1304 = vmul.f32 %v1272, 0.01
      %v1305 = vmul.f32 %v1273, 0.01
      %v1306 = vmul.f32 %v1274, 0.01
      %v1307 = vmul.f32 %v1275, 0.01
      %v1308 = vmul.f32 %v1276, 0.01
      %v1309 = vmul.f32 %v1277, 0.01
      %v1310 = vmul.f32 %v1278, 0.01
      %v1311 = vmax.f32 %v1247, %v1279
      %v1312 = vmax.f32 %v1248, %v1280
      %v1313 = vmax.f32 %v1249, %v1281
      %v1314 = vmax.f32 %v1250, %v1282
      %v1315 = vmax.f32 %v1251, %v1283
      %v1316 = vmax.f32 %v1252, %v1284
      %v1317 = vmax.f32 %v1253, %v1285
      %v1318 = vmax.f32 %v1254, %v1286
      %v1319 = vmax.f32 %v1255, %v1287
      %v1320 = vmax.f32 %v1256, %v1288
      %v1321 = vmax.f32 %v1257, %v1289
      %v1322 = vmax.f32 %v1258, %v1290
      %v1323 = vmax.f32 %v1259, %v1291
      %v1324 = vmax.f32 %v1260, %v1292
      %v1325 = vmax.f32 %v1261, %v1293
      %v1326 = vmax.f32 %v1262, %v1294
      %v1327 = vmax.f32 %v1263, %v1295
      %v1328 = vmax.f32 %v1264, %v1296
      %v1329 = vmax.f32 %v1265, %v1297
      %v1330 = vmax.f32 %v1266, %v1298
      %v1331 = vmax.f32 %v1267, %v1299
      %v1332 = vmax.f32 %v1268, %v1300
      %v1333 = vmax.f32 %v1269, %v1301
      %v1334 = vmax.f32 %v1270, %v1302
      %v1335 = vmax.f32 %v1271, %v1303
      %v1336 = vmax.f32 %v1272, %v1304
      %v1337 = vmax.f32 %v1273, %v1305
      %v1338 = vmax.f32 %v1274, %v1306
      %v1339 = vmax.f32 %v1275, %v1307
      %v1340 = vmax.f32 %v1276, %v1308
      %v1341 = vmax.f32 %v1277, %v1309
      %v1342 = vmax.f32 %v1278, %v1310
      %v1343 = vadd.f32 %v1311, %v245
      %v1344 = vadd.f32 %v1312, %v246
      %v1345 = vadd.f32 %v1313, %v247
      %v1346 = vadd.f32 %v1314, %v248
      %v1347 = vadd.f32 %v1315, %v249
      %v1348 = vadd.f32 %v1316, %v250
      %v1349 = vadd.f32 %v1317, %v251
      %v1350 = vadd.f32 %v1318, %v252
      %v1351 = vadd.f32 %v1319, %v253
      %v1352 = vadd.f32 %v1320, %v254
      %v1353 = vadd.f32 %v1321, %v255
      %v1354 = vadd.f32 %v1322, %v256
      %v1355 = vadd.f32 %v1323, %v257
      %v1356 = vadd.f32 %v1324, %v258
      %v1357 = vadd.f32 %v1325, %v259
      %v1358 = vadd.f32 %v1326, %v260
      %v1359 = vadd.f32 %v1327, %v261
      %v1360 = vadd.f32 %v1328, %v262
      %v1361 = vadd.f32 %v1329, %v263
      %v1362 = vadd.f32 %v1330, %v264
      %v1363 = vadd.f32 %v1331, %v265
      %v1364 = vadd.f32 %v1332, %v266
      %v1365 = vadd.f32 %v1333, %v267
      %v1366 = vadd.f32 %v1334, %v268
      %v1367 = vadd.f32 %v1335, %v269
      %v1368 = vadd.f32 %v1336, %v270
      %v1369 = vadd.f32 %v1337, %v271
      %v1370 = vadd.f32 %v1338, %v272
      %v1371 = vadd.f32 %v1339, %v273
      %v1372 = vadd.f32 %v1340, %v274
      %v1373 = vadd.f32 %v1341, %v275
      %v1374 = vadd.f32 %v1342, %v276
      %v1375 = vmax.f32 %v1343, %v1344
      %1376 = vmax.xlane.f32.xlu0 %v1375
      %v1377 = vpop.xlane.xlu0 %1376
      %v1378 = vmax.f32 %v1345, %v1346
      %1379 = vmax.xlane.f32.xlu0 %v1378
      %v1380 = vpop.xlane.xlu0 %1379
      %v1381 = vmax.f32 %v1347, %v1348
      %1382 = vmax.xlane.f32.xlu0 %v1381
      %v1383 = vpop.xlane.xlu0 %1382
      %v1384 = vmax.f32 %v1349, %v1350
      %1385 = vmax.xlane.f32.xlu0 %v1384
      %v1386 = vpop.xlane.xlu0 %1385
      %v1387 = vmax.f32 %v1351, %v1352
      %1388 = vmax.xlane.f32.xlu0 %v1387
      %v1389 = vpop.xlane.xlu0 %1388
      %v1390 = vmax.f32 %v1353, %v1354
      %1391 = vmax.xlane.f32.xlu0 %v1390
      %v1392 = vpop.xlane.xlu0 %1391
      %v1393 = vmax.f32 %v1355, %v1356
      %1394 = vmax.xlane.f32.xlu0 %v1393
      %v1395 = vpop.xlane.xlu0 %1394
      %v1396 = vmax.f32 %v1357, %v1358
      %1397 = vmax.xlane.f32.xlu0 %v1396
      %v1398 = vpop.xlane.xlu0 %1397
      %v1399 = vmax.f32 %v1359, %v1360
      %1400 = vmax.xlane.f32.xlu0 %v1399
      %v1401 = vpop.xlane.xlu0 %1400
      %v1402 = vmax.f32 %v1361, %v1362
      %1403 = vmax.xlane.f32.xlu0 %v1402
      %v1404 = vpop.xlane.xlu0 %1403
      %v1405 = vmax.f32 %v1363, %v1364
      %1406 = vmax.xlane.f32.xlu0 %v1405
      %v1407 = vpop.xlane.xlu0 %1406
      %v1408 = vmax.f32 %v1365, %v1366
      %1409 = vmax.xlane.f32.xlu0 %v1408
      %v1410 = vpop.xlane.xlu0 %1409
      %v1411 = vmax.f32 %v1367, %v1368
      %1412 = vmax.xlane.f32.xlu0 %v1411
      %v1413 = vpop.xlane.xlu0 %1412
      %v1414 = vmax.f32 %v1369, %v1370
      %1415 = vmax.xlane.f32.xlu0 %v1414
      %v1416 = vpop.xlane.xlu0 %1415
      %v1417 = vmax.f32 %v1371, %v1372
      %1418 = vmax.xlane.f32.xlu0 %v1417
      %v1419 = vpop.xlane.xlu0 %1418
      %v1420 = vmax.f32 %v1373, %v1374
      %1421 = vmax.xlane.f32.xlu0 %v1420
      %v1422 = vpop.xlane.xlu0 %1421
      %v1423 = vsub.f32 %v1343, %v1377
      %v1424 = vsub.f32 %v1344, %v1377
      %v1425 = vsub.f32 %v1345, %v1380
      %v1426 = vsub.f32 %v1346, %v1380
      %v1427 = vsub.f32 %v1347, %v1383
      %v1428 = vsub.f32 %v1348, %v1383
      %v1429 = vsub.f32 %v1349, %v1386
      %v1430 = vsub.f32 %v1350, %v1386
      %v1431 = vsub.f32 %v1351, %v1389
      %v1432 = vsub.f32 %v1352, %v1389
      %v1433 = vsub.f32 %v1353, %v1392
      %v1434 = vsub.f32 %v1354, %v1392
      %v1435 = vsub.f32 %v1355, %v1395
      %v1436 = vsub.f32 %v1356, %v1395
      %v1437 = vsub.f32 %v1357, %v1398
      %v1438 = vsub.f32 %v1358, %v1398
      %v1439 = vsub.f32 %v1359, %v1401
      %v1440 = vsub.f32 %v1360, %v1401
      %v1441 = vsub.f32 %v1361, %v1404
      %v1442 = vsub.f32 %v1362, %v1404
      %v1443 = vsub.f32 %v1363, %v1407
      %v1444 = vsub.f32 %v1364, %v1407
      %v1445 = vsub.f32 %v1365, %v1410
      %v1446 = vsub.f32 %v1366, %v1410
      %v1447 = vsub.f32 %v1367, %v1413
      %v1448 = vsub.f32 %v1368, %v1413
      %v1449 = vsub.f32 %v1369, %v1416
      %v1450 = vsub.f32 %v1370, %v1416
      %v1451 = vsub.f32 %v1371, %v1419
      %v1452 = vsub.f32 %v1372, %v1419
      %v1453 = vsub.f32 %v1373, %v1422
      %v1454 = vsub.f32 %v1374, %v1422
      %v1455 = vmul.f32 %v1423, 1.442695
      %v1456 = vpow.pop %v1455
      %v1457 = vmul.f32 %v1424, 1.442695
      %v1458 = vpow.pop %v1457
      %v1459 = vmul.f32 %v1425, 1.442695
      %v1460 = vpow.pop %v1459
      %v1461 = vmul.f32 %v1426, 1.442695
      %v1462 = vpow.pop %v1461
      %v1463 = vmul.f32 %v1427, 1.442695
      %v1464 = vpow.pop %v1463
      %v1465 = vmul.f32 %v1428, 1.442695
      %v1466 = vpow.pop %v1465
      %v1467 = vmul.f32 %v1429, 1.442695
      %v1468 = vpow.pop %v1467
      %v1469 = vmul.f32 %v1430, 1.442695
      %v1470 = vpow.pop %v1469
      %v1471 = vmul.f32 %v1431, 1.442695
      %v1472 = vpow.pop %v1471
      %v1473 = vmul.f32 %v1432, 1.442695
      %v1474 = vpow.pop %v1473
      %v1475 = vmul.f32 %v1433, 1.442695
      %v1476 = vpow.pop %v1475
      %v1477 = vmul.f32 %v1434, 1.442695
      %v1478 = vpow.pop %v1477
      %v1479 = vmul.f32 %v1435, 1.442695
      %v1480 = vpow.pop %v1479
      %v1481 = vmul.f32 %v1436, 1.442695
      %v1482 = vpow.pop %v1481
      %v1483 = vmul.f32 %v1437, 1.442695
      %v1484 = vpow.pop %v1483
      %v1485 = vmul.f32 %v1438, 1.442695
      %v1486 = vpow.pop %v1485
      %v1487 = vmul.f32 %v1439, 1.442695
      %v1488 = vpow.pop %v1487
      %v1489 = vmul.f32 %v1440, 1.442695
      %v1490 = vpow.pop %v1489
      %v1491 = vmul.f32 %v1441, 1.442695
      %v1492 = vpow.pop %v1491
      %v1493 = vmul.f32 %v1442, 1.442695
      %v1494 = vpow.pop %v1493
      %v1495 = vmul.f32 %v1443, 1.442695
      %v1496 = vpow.pop %v1495
      %v1497 = vmul.f32 %v1444, 1.442695
      %v1498 = vpow.pop %v1497
      %v1499 = vmul.f32 %v1445, 1.442695
      %v1500 = vpow.pop %v1499
      %v1501 = vmul.f32 %v1446, 1.442695
      %v1502 = vpow.pop %v1501
      %v1503 = vmul.f32 %v1447, 1.442695
      %v1504 = vpow.pop %v1503
      %v1505 = vmul.f32 %v1448, 1.442695
      %v1506 = vpow.pop %v1505
      %v1507 = vmul.f32 %v1449, 1.442695
      %v1508 = vpow.pop %v1507
      %v1509 = vmul.f32 %v1450, 1.442695
      %v1510 = vpow.pop %v1509
      %v1511 = vmul.f32 %v1451, 1.442695
      %v1512 = vpow.pop %v1511
      %v1513 = vmul.f32 %v1452, 1.442695
      %v1514 = vpow.pop %v1513
      %v1515 = vmul.f32 %v1453, 1.442695
      %v1516 = vpow.pop %v1515
      %v1517 = vmul.f32 %v1454, 1.442695
      %v1518 = vpow.pop %v1517
      %v1519 = vadd.f32 %v1456, %v1458
      %1520 = vadd.xlane.f32.xlu0 %v1519
      %v1521 = vpop.xlane.xlu0 %1520
      %v1522 = vadd.f32 %v1460, %v1462
      %1523 = vadd.xlane.f32.xlu0 %v1522
      %v1524 = vpop.xlane.xlu0 %1523
      %v1525 = vadd.f32 %v1464, %v1466
      %1526 = vadd.xlane.f32.xlu0 %v1525
      %v1527 = vpop.xlane.xlu0 %1526
      %v1528 = vadd.f32 %v1468, %v1470
      %1529 = vadd.xlane.f32.xlu0 %v1528
      %v1530 = vpop.xlane.xlu0 %1529
      %v1531 = vadd.f32 %v1472, %v1474
      %1532 = vadd.xlane.f32.xlu0 %v1531
      %v1533 = vpop.xlane.xlu0 %1532
      %v1534 = vadd.f32 %v1476, %v1478
      %1535 = vadd.xlane.f32.xlu0 %v1534
      %v1536 = vpop.xlane.xlu0 %1535
      %v1537 = vadd.f32 %v1480, %v1482
      %1538 = vadd.xlane.f32.xlu0 %v1537
      %v1539 = vpop.xlane.xlu0 %1538
      %v1540 = vadd.f32 %v1484, %v1486
      %1541 = vadd.xlane.f32.xlu0 %v1540
      %v1542 = vpop.xlane.xlu0 %1541
      %v1543 = vadd.f32 %v1488, %v1490
      %1544 = vadd.xlane.f32.xlu0 %v1543
      %v1545 = vpop.xlane.xlu0 %1544
      %v1546 = vadd.f32 %v1492, %v1494
      %1547 = vadd.xlane.f32.xlu0 %v1546
      %v1548 = vpop.xlane.xlu0 %1547
      %v1549 = vadd.f32 %v1496, %v1498
      %1550 = vadd.xlane.f32.xlu0 %v1549
      %v1551 = vpop.xlane.xlu0 %1550
      %v1552 = vadd.f32 %v1500, %v1502
      %1553 = vadd.xlane.f32.xlu0 %v1552
      %v1554 = vpop.xlane.xlu0 %1553
      %v1555 = vadd.f32 %v1504, %v1506
      %1556 = vadd.xlane.f32.xlu0 %v1555
      %v1557 = vpop.xlane.xlu0 %1556
      %v1558 = vadd.f32 %v1508, %v1510
      %1559 = vadd.xlane.f32.xlu0 %v1558
      %v1560 = vpop.xlane.xlu0 %1559
      %v1561 = vadd.f32 %v1512, %v1514
      %1562 = vadd.xlane.f32.xlu0 %v1561
      %v1563 = vpop.xlane.xlu0 %1562
      %v1564 = vadd.f32 %v1516, %v1518
      %1565 = vadd.xlane.f32.xlu0 %v1564
      %v1566 = vpop.xlane.xlu0 %1565
      %v1567 = vmax.f32 %v1521, 1e-20
      %v1568 = vmax.f32 %v1524, 1e-20
      %v1569 = vmax.f32 %v1527, 1e-20
      %v1570 = vmax.f32 %v1530, 1e-20
      %v1571 = vmax.f32 %v1533, 1e-20
      %v1572 = vmax.f32 %v1536, 1e-20
      %v1573 = vmax.f32 %v1539, 1e-20
      %v1574 = vmax.f32 %v1542, 1e-20
      %v1575 = vmax.f32 %v1545, 1e-20
      %v1576 = vmax.f32 %v1548, 1e-20
      %v1577 = vmax.f32 %v1551, 1e-20
      %v1578 = vmax.f32 %v1554, 1e-20
      %v1579 = vmax.f32 %v1557, 1e-20
      %v1580 = vmax.f32 %v1560, 1e-20
      %v1581 = vmax.f32 %v1563, 1e-20
      %v1582 = vmax.f32 %v1566, 1e-20
      %v1583 = vpack.c.bf16 %v1460, %v1456
      %v1584 = vpack.c.bf16 %v1462, %v1458
      %v1585 = vpack.c.bf16 %v1468, %v1464
      %v1586 = vpack.c.bf16 %v1470, %v1466
      %v1587 = vpack.c.bf16 %v1476, %v1472
      %v1588 = vpack.c.bf16 %v1478, %v1474
      %v1589 = vpack.c.bf16 %v1484, %v1480
      %v1590 = vpack.c.bf16 %v1486, %v1482
      %v1591 = vpack.c.bf16 %v1492, %v1488
      %v1592 = vpack.c.bf16 %v1494, %v1490
      %v1593 = vpack.c.bf16 %v1500, %v1496
      %v1594 = vpack.c.bf16 %v1502, %v1498
      %v1595 = vpack.c.bf16 %v1508, %v1504
      %v1596 = vpack.c.bf16 %v1510, %v1506
      %v1597 = vpack.c.bf16 %v1516, %v1512
      %v1598 = vpack.c.bf16 %v1518, %v1514
      %v1631 = vunpack.c.l.b16 %v1106
      %v1632 = vunpack.c.l.b16 %v1107
      %v1633 = vunpack.c.l.b16 %v1108
      %v1634 = vunpack.c.l.b16 %v1109
      %v1635 = vunpack.c.l.b16 %v1110
      %v1636 = vunpack.c.l.b16 %v1111
      %v1637 = vunpack.c.l.b16 %v1112
      %v1638 = vunpack.c.l.b16 %v1113
      %v1639 = vunpack.c.l.b16 %v1114
      %v1640 = vunpack.c.l.b16 %v1115
      %v1641 = vunpack.c.l.b16 %v1116
      %v1642 = vunpack.c.l.b16 %v1117
      %v1643 = vunpack.c.l.b16 %v1118
      %v1644 = vunpack.c.l.b16 %v1119
      %v1645 = vunpack.c.l.b16 %v1120
      %v1646 = vunpack.c.l.b16 %v1121
      %v1647 = vunpack.c.l.b16 %v1122
      %v1648 = vunpack.c.l.b16 %v1123
      %v1649 = vunpack.c.l.b16 %v1124
      %v1650 = vunpack.c.l.b16 %v1125
      %v1651 = vunpack.c.l.b16 %v1126
      %v1652 = vunpack.c.l.b16 %v1127
      %v1653 = vunpack.c.l.b16 %v1128
      %v1654 = vunpack.c.l.b16 %v1129
      %v1655 = vunpack.c.l.b16 %v1130
      %v1656 = vunpack.c.l.b16 %v1131
      %v1657 = vunpack.c.l.b16 %v1132
      %v1658 = vunpack.c.l.b16 %v1133
      %v1659 = vunpack.c.l.b16 %v1134
      %v1660 = vunpack.c.l.b16 %v1135
      %v1661 = vunpack.c.l.b16 %v1136
      %v1662 = vunpack.c.l.b16 %v1137
      %v1663 = vpack.c.b16 %v1632, %v1631
      %v1664 = vpack.c.b16 %v1634, %v1633
      %v1665 = vpack.c.b16 %v1636, %v1635
      %v1666 = vpack.c.b16 %v1638, %v1637
      %v1667 = vpack.c.b16 %v1640, %v1639
      %v1668 = vpack.c.b16 %v1642, %v1641
      %v1669 = vpack.c.b16 %v1644, %v1643
      %v1670 = vpack.c.b16 %v1646, %v1645
      %v1671 = vpack.c.b16 %v1648, %v1647
      %v1672 = vpack.c.b16 %v1650, %v1649
      %v1673 = vpack.c.b16 %v1652, %v1651
      %v1674 = vpack.c.b16 %v1654, %v1653
      %v1675 = vpack.c.b16 %v1656, %v1655
      %v1676 = vpack.c.b16 %v1658, %v1657
      %v1677 = vpack.c.b16 %v1660, %v1659
      %v1678 = vpack.c.b16 %v1662, %v1661
      %1695 = vmatprep.subr.bf16.mxu0 0
      %1696 = vmatpush1.bf16.msra.mxu0 %v1663
      %1697 = vmatprep.subr.bf16.mxu0 0
      %1698 = vmatpush1.bf16.msra.mxu0 %v1664
      %1699 = vmatprep.subr.bf16.mxu0 0
      %1700 = vmatpush1.bf16.msra.mxu0 %v1665
      %1701 = vmatprep.subr.bf16.mxu0 0
      %1702 = vmatpush1.bf16.msra.mxu0 %v1666
      %1703 = vmatprep.subr.bf16.mxu0 0
      %1704 = vmatpush1.bf16.msra.mxu0 %v1667
      %1705 = vmatprep.subr.bf16.mxu0 0
      %1706 = vmatpush1.bf16.msra.mxu0 %v1668
      %1707 = vmatprep.subr.bf16.mxu0 0
      %1708 = vmatpush1.bf16.msra.mxu0 %v1669
      %1709 = vmatprep.subr.bf16.mxu0 0
      %1710 = vmatpush1.bf16.msra.mxu0 %v1670
      %1711 = vmatprep.subr.bf16.mxu0 0
      %1712 = vmatpush1.bf16.msra.mxu0 %v1671
      %1713 = vmatprep.subr.bf16.mxu0 0
      %1714 = vmatpush1.bf16.msra.mxu0 %v1672
      %1715 = vmatprep.subr.bf16.mxu0 0
      %1716 = vmatpush1.bf16.msra.mxu0 %v1673
      %1717 = vmatprep.subr.bf16.mxu0 0
      %1718 = vmatpush1.bf16.msra.mxu0 %v1674
      %1719 = vmatprep.subr.bf16.mxu0 0
      %1720 = vmatpush1.bf16.msra.mxu0 %v1675
      %1721 = vmatprep.subr.bf16.mxu0 0
      %1722 = vmatpush1.bf16.msra.mxu0 %v1676
      %1723 = vmatprep.subr.bf16.mxu0 0
      %1724 = vmatpush1.bf16.msra.mxu0 %v1677
      %1725 = vmatprep.subr.bf16.mxu0 0
      %1726 = vmatpush1.bf16.msra.mxu0 %v1678
      %1727 = vmatprep.mubr.bf16.mxu0 %v1584
      %1728 = vmatmul.mubr.bf16.gmra.mrb[0].mxu0 %v1583
      %v1729 = vpop.f32.mrb[0].mxu0
      %v1730 = vadd.f32 0.0, %v1729
      %v1731 = vpop.f32.mrb[0].mxu0
      %v1732 = vpop.f32.mrb[0].mxu0
      %v1733 = vadd.f32 0.0, %v1732
      %v1734 = vpop.f32.mrb[0].mxu0
      %1735 = vmatprep.mubr.bf16.mxu0 %v1586
      %1736 = vmatmul.mubr.bf16.gmra.mrb[0].mxu0 %v1585
      %v1737 = vpop.f32.mrb[0].mxu0
      %v1738 = vadd.f32 0.0, %v1737
      %v1739 = vpop.f32.mrb[0].mxu0
      %v1740 = vpop.f32.mrb[0].mxu0
      %v1741 = vadd.f32 0.0, %v1740
      %v1742 = vpop.f32.mrb[0].mxu0
      %1743 = vmatprep.mubr.bf16.mxu0 %v1588
      %1744 = vmatmul.mubr.bf16.gmra.mrb[0].mxu0 %v1587
      %v1745 = vpop.f32.mrb[0].mxu0
      %v1746 = vadd.f32 0.0, %v1745
      %v1747 = vpop.f32.mrb[0].mxu0
      %v1748 = vpop.f32.mrb[0].mxu0
      %v1749 = vadd.f32 0.0, %v1748
      %v1750 = vpop.f32.mrb[0].mxu0
      %1751 = vmatprep.mubr.bf16.mxu0 %v1590
      %1752 = vmatmul.mubr.bf16.gmra.mrb[0].mxu0 %v1589
      %v1753 = vpop.f32.mrb[0].mxu0
      %v1754 = vadd.f32 0.0, %v1753
      %v1755 = vpop.f32.mrb[0].mxu0
      %v1756 = vpop.f32.mrb[0].mxu0
      %v1757 = vadd.f32 0.0, %v1756
      %v1758 = vpop.f32.mrb[0].mxu0
      %1759 = vmatprep.mubr.bf16.mxu0 %v1592
      %1760 = vmatmul.mubr.bf16.gmra.mrb[0].mxu0 %v1591
      %v1761 = vpop.f32.mrb[0].mxu0
      %v1762 = vadd.f32 0.0, %v1761
      %v1763 = vpop.f32.mrb[0].mxu0
      %v1764 = vpop.f32.mrb[0].mxu0
      %v1765 = vadd.f32 0.0, %v1764
      %v1766 = vpop.f32.mrb[0].mxu0
      %1767 = vmatprep.mubr.bf16.mxu0 %v1594
      %1768 = vmatmul.mubr.bf16.gmra.mrb[0].mxu0 %v1593
      %v1769 = vpop.f32.mrb[0].mxu0
      %v1770 = vadd.f32 0.0, %v1769
      %v1771 = vpop.f32.mrb[0].mxu0
      %v1772 = vpop.f32.mrb[0].mxu0
      %v1773 = vadd.f32 0.0, %v1772
      %v1774 = vpop.f32.mrb[0].mxu0
      %1775 = vmatprep.mubr.bf16.mxu0 %v1596
      %1776 = vmatmul.mubr.bf16.gmra.mrb[0].mxu0 %v1595
      %v1777 = vpop.f32.mrb[0].mxu0
      %v1778 = vadd.f32 0.0, %v1777
      %v1779 = vpop.f32.mrb[0].mxu0
      %v1780 = vpop.f32.mrb[0].mxu0
      %v1781 = vadd.f32 0.0, %v1780
      %v1782 = vpop.f32.mrb[0].mxu0
      %1783 = vmatprep.mubr.bf16.mxu0 %v1598
      %1784 = vmatmul.mubr.bf16.gmra.mrb[0].mxu0 %v1597
      %v1785 = vpop.f32.mrb[0].mxu0
      %v1786 = vadd.f32 0.0, %v1785
      %v1787 = vpop.f32.mrb[0].mxu0
      %v1788 = vpop.f32.mrb[0].mxu0
      %v1789 = vadd.f32 0.0, %v1788
      %v1790 = vpop.f32.mrb[0].mxu0
      %1791 = vdwg.mxu0
      %v1792 = vrcp.pop %v1567
      %v1793 = vrcp.pop %v1568
      %v1794 = vrcp.pop %v1569
      %v1795 = vrcp.pop %v1570
      %v1796 = vrcp.pop %v1571
      %v1797 = vrcp.pop %v1572
      %v1798 = vrcp.pop %v1573
      %v1799 = vrcp.pop %v1574
      %v1800 = vrcp.pop %v1575
      %v1801 = vrcp.pop %v1576
      %v1802 = vrcp.pop %v1577
      %v1803 = vrcp.pop %v1578
      %v1804 = vrcp.pop %v1579
      %v1805 = vrcp.pop %v1580
      %v1806 = vrcp.pop %v1581
      %v1807 = vrcp.pop %v1582
      %v1808 = vmul.f32 %v1730, %v1792
      %v1809 = vmul.f32 %v1733, %v1793
      %v1810 = vmul.f32 %v1738, %v1794
      %v1811 = vmul.f32 %v1741, %v1795
      %v1812 = vmul.f32 %v1746, %v1796
      %v1813 = vmul.f32 %v1749, %v1797
      %v1814 = vmul.f32 %v1754, %v1798
      %v1815 = vmul.f32 %v1757, %v1799
      %v1816 = vmul.f32 %v1762, %v1800
      %v1817 = vmul.f32 %v1765, %v1801
      %v1818 = vmul.f32 %v1770, %v1802
      %v1819 = vmul.f32 %v1773, %v1803
      %v1820 = vmul.f32 %v1778, %v1804
      %v1821 = vmul.f32 %v1781, %v1805
      %v1822 = vmul.f32 %v1786, %v1806
      %v1823 = vmul.f32 %v1789, %v1807
      %vm1824 = vcmp.gt.f32.partialorder %v1808, 0.0
      %vm1825 = vcmp.gt.f32.partialorder %v1809, 0.0
      %vm1826 = vcmp.gt.f32.partialorder %v1810, 0.0
      %vm1827 = vcmp.gt.f32.partialorder %v1811, 0.0
      %vm1828 = vcmp.gt.f32.partialorder %v1812, 0.0
      %vm1829 = vcmp.gt.f32.partialorder %v1813, 0.0
      %vm1830 = vcmp.gt.f32.partialorder %v1814, 0.0
      %vm1831 = vcmp.gt.f32.partialorder %v1815, 0.0
      %vm1832 = vcmp.gt.f32.partialorder %v1816, 0.0
      %vm1833 = vcmp.gt.f32.partialorder %v1817, 0.0
      %vm1834 = vcmp.gt.f32.partialorder %v1818, 0.0
      %vm1835 = vcmp.gt.f32.partialorder %v1819, 0.0
      %vm1836 = vcmp.gt.f32.partialorder %v1820, 0.0
      %vm1837 = vcmp.gt.f32.partialorder %v1821, 0.0
      %vm1838 = vcmp.gt.f32.partialorder %v1822, 0.0
      %vm1839 = vcmp.gt.f32.partialorder %v1823, 0.0
      %v1840 = vmin.f32 %v1808, 0.0
      %v1841 = vmin.f32 %v1809, 0.0
      %v1842 = vmin.f32 %v1810, 0.0
      %v1843 = vmin.f32 %v1811, 0.0
      %v1844 = vmin.f32 %v1812, 0.0
      %v1845 = vmin.f32 %v1813, 0.0
      %v1846 = vmin.f32 %v1814, 0.0
      %v1847 = vmin.f32 %v1815, 0.0
      %v1848 = vmin.f32 %v1816, 0.0
      %v1849 = vmin.f32 %v1817, 0.0
      %v1850 = vmin.f32 %v1818, 0.0
      %v1851 = vmin.f32 %v1819, 0.0
      %v1852 = vmin.f32 %v1820, 0.0
      %v1853 = vmin.f32 %v1821, 0.0
      %v1854 = vmin.f32 %v1822, 0.0
      %v1855 = vmin.f32 %v1823, 0.0
      %v1856 = vmul.f32 %v1840, 1.442695
      %v1857 = vpow.pop %v1856
      %v1858 = vmul.f32 %v1841, 1.442695
      %v1859 = vpow.pop %v1858
      %v1860 = vmul.f32 %v1842, 1.442695
      %v1861 = vpow.pop %v1860
      %v1862 = vmul.f32 %v1843, 1.442695
      %v1863 = vpow.pop %v1862
      %v1864 = vmul.f32 %v1844, 1.442695
      %v1865 = vpow.pop %v1864
      %v1866 = vmul.f32 %v1845, 1.442695
      %v1867 = vpow.pop %v1866
      %v1868 = vmul.f32 %v1846, 1.442695
      %v1869 = vpow.pop %v1868
      %v1870 = vmul.f32 %v1847, 1.442695
      %v1871 = vpow.pop %v1870
      %v1872 = vmul.f32 %v1848, 1.442695
      %v1873 = vpow.pop %v1872
      %v1874 = vmul.f32 %v1849, 1.442695
      %v1875 = vpow.pop %v1874
      %v1876 = vmul.f32 %v1850, 1.442695
      %v1877 = vpow.pop %v1876
      %v1878 = vmul.f32 %v1851, 1.442695
      %v1879 = vpow.pop %v1878
      %v1880 = vmul.f32 %v1852, 1.442695
      %v1881 = vpow.pop %v1880
      %v1882 = vmul.f32 %v1853, 1.442695
      %v1883 = vpow.pop %v1882
      %v1884 = vmul.f32 %v1854, 1.442695
      %v1885 = vpow.pop %v1884
      %v1886 = vmul.f32 %v1855, 1.442695
      %v1887 = vpow.pop %v1886
      %v1888 = vsub.f32 %v1857, 1.0
      %v1889 = vsub.f32 %v1859, 1.0
      %v1890 = vsub.f32 %v1861, 1.0
      %v1891 = vsub.f32 %v1863, 1.0
      %v1892 = vsub.f32 %v1865, 1.0
      %v1893 = vsub.f32 %v1867, 1.0
      %v1894 = vsub.f32 %v1869, 1.0
      %v1895 = vsub.f32 %v1871, 1.0
      %v1896 = vsub.f32 %v1873, 1.0
      %v1897 = vsub.f32 %v1875, 1.0
      %v1898 = vsub.f32 %v1877, 1.0
      %v1899 = vsub.f32 %v1879, 1.0
      %v1900 = vsub.f32 %v1881, 1.0
      %v1901 = vsub.f32 %v1883, 1.0
      %v1902 = vsub.f32 %v1885, 1.0
      %v1903 = vsub.f32 %v1887, 1.0
      %v1904 = vsel %vm1824, %v1808, %v1888
      %v1905 = vsel %vm1825, %v1809, %v1889
      %v1906 = vsel %vm1826, %v1810, %v1890
      %v1907 = vsel %vm1827, %v1811, %v1891
      %v1908 = vsel %vm1828, %v1812, %v1892
      %v1909 = vsel %vm1829, %v1813, %v1893
      %v1910 = vsel %vm1830, %v1814, %v1894
      %v1911 = vsel %vm1831, %v1815, %v1895
      %v1912 = vsel %vm1832, %v1816, %v1896
      %v1913 = vsel %vm1833, %v1817, %v1897
      %v1914 = vsel %vm1834, %v1818, %v1898
      %v1915 = vsel %vm1835, %v1819, %v1899
      %v1916 = vsel %vm1836, %v1820, %v1900
      %v1917 = vsel %vm1837, %v1821, %v1901
      %v1918 = vsel %vm1838, %v1822, %v1902
      %v1919 = vsel %vm1839, %v1823, %v1903
      %v1920 = vpack.c.bf16 %v1905, %v1904
      %v1921 = vpack.c.bf16 %v1907, %v1906
      %v1922 = vpack.c.bf16 %v1909, %v1908
      %v1923 = vpack.c.bf16 %v1911, %v1910
      %v1924 = vpack.c.bf16 %v1913, %v1912
      %v1925 = vpack.c.bf16 %v1915, %v1914
      %v1926 = vpack.c.bf16 %v1917, %v1916
      %v1927 = vpack.c.bf16 %v1919, %v1918
      %1928 = vst [vmem:[%s226 + $0x8] sm:$0xff] %v1920
      %1929 = vst [vmem:[%s226 + $0x18] sm:$0xff] %v1921
      %1930 = vst [vmem:[%s226 + $0x28] sm:$0xff] %v1922
      %1931 = vst [vmem:[%s226 + $0x38] sm:$0xff] %v1923
      %1932 = vst [vmem:[%s226 + $0x48] sm:$0xff] %v1924
      %1933 = vst [vmem:[%s226 + $0x58] sm:$0xff] %v1925
      %1934 = vst [vmem:[%s226 + $0x68] sm:$0xff] %v1926
      %1935 = vst [vmem:[%s226 + $0x78] sm:$0xff] %v1927
      %s1936 = smul.u32 8, %s15
      %p1937 = scmp.lt.s32.totalorder %s1936, 15
      %s1938 = scalar_select %p1937, %s1936, 15
      %s1939 = smul.addr %s1938, 2
      %s1940 = smul.addr %s1939, 8
      %s1941 = scalar_lea.vmem %s4, %s1940
      // Predicated region
      $region37: #{gat_forward.2} parent=35 // pred_check
        %p1942 = pneg %p127
      $region38: #{gat_forward.2} parent=35 // pred_check_branch
        %1944 = sbr.rel (%p1942) target = $region40
      $region39: #{gat_forward.2} parent=35 // pred_region
        %s1945 = smul.u32 8, %s15
      $region40: #{gat_forward.2} parent=35 // pred_fallthru
        _
    $region36: #{gat_forward.2} parent=5 // pred_fallthru
      _
    %p1946 = scmp.le.s32.totalorder 2, %s10
    // Predicated region
    $region41: #{gat_forward.2} parent=5 // pred_check
      %p1947 = pneg %p1946
    $region42: #{gat_forward.2} parent=5 // pred_check_branch
      %1949 = sbr.rel (%p1947) target = $region44
    $region43: #{gat_forward.2} parent=5 // pred_region
      %s1950 = ssub.s32 %s10, 2
      // Predicated region
      $region45: #{gat_forward.2} parent=43 // pred_check
        %p1951 = pneg %p133
      $region46: #{gat_forward.2} parent=43 // pred_check_branch
        %1953 = sbr.rel (%p1951) target = $region48
      $region47: #{gat_forward.2} parent=43 // pred_region
        %s1954 = smul.u32 8, %s16
        %p1955 = scmp.lt.s32.totalorder %s1954, 15
        %s1956 = scalar_select %p1955, %s1954, 15
        %s1957 = smul.addr %s1956, 2
        %s1958 = smul.addr %s1957, 8
        %s1959 = scalar_lea.vmem %s4, %s1958
      $region48: #{gat_forward.2} parent=43 // pred_fallthru
        _
    $region44: #{gat_forward.2} parent=5 // pred_fallthru
      _
  $region6: #{gat_forward.2} parent=0 // loop_footer
    %s14 = sadd.s32 1, %s10
  $region7: #{gat_forward.2} parent=0 // loop_footer_branch
    %9 = sbr.rel target = $region3
  $region8: #{gat_forward.2} parent=0 // loop_exit
    _

</llo_original>
